<compile_context>
chip_gen: v5e
topology: v5e:2x2
jax: 0.10.0
libtpu: 0.0.40
codegen_flags: <defaults>
</compile_context>

<pallas_src>
import jax
import jax.numpy as jnp
from jax import lax
from jax.experimental import pallas as pl
from jax.experimental.pallas import tpu as pltpu

# ----------------------------- small BERT config -----------------------------
VOCAB = 64
MAX_POS = 16
TYPE_VOCAB = 2
HIDDEN = 32
N_HEADS = 2
HEAD_DIM = HIDDEN // N_HEADS
INTERMEDIATE = 64
N_LAYERS = 2
LN_EPS = 1e-12
N_SENTIMENT_CLASSES = 5
ATTN_SCALE = 1.0 / (HEAD_DIM ** 0.5)
NEG_INF = -10000.0          # HF extended_attention_mask value


# ------------------------------- fused kernel ---------------------------------
def _layer_norm(x, g, b):
    mu = jnp.mean(x, axis=-1, keepdims=True)
    var = jnp.mean(jnp.square(x - mu), axis=-1, keepdims=True)
    return (x - mu) * lax.rsqrt(var + LN_EPS) * g + b


def _encoder_kernel(emb_ref, kmask_ref,
                    emb_ln_g_ref, emb_ln_b_ref,
                    qkv_w_ref, qkv_b_ref,
                    attn_w_ref, attn_b_ref,
                    ln1_g_ref, ln1_b_ref,
                    ffn_in_w_ref, ffn_in_b_ref,
                    ffn_out_w_ref, ffn_out_b_ref,
                    ln2_g_ref, ln2_b_ref,
                    pooler_w_ref, pooler_b_ref,
                    pooled_ref,
                    x_scratch, ctx_scratch):
    """One grid step = one transformer layer of one sentence.

    grid = (B, N_LAYERS); sentence axis "parallel" (megacore), layer axis "arbitrary".
    x_scratch carries the (S, H) activation across the layer axis.
    """
    l = pl.program_id(1)
    H, NH, D = HIDDEN, N_HEADS, HEAD_DIM

    # Layer 0: embedding LayerNorm into the resident activation scratch (fused in-kernel).
    @pl.when(l == 0)
    def _():
        x_scratch[...] = _layer_norm(emb_ref[0].astype(jnp.float32),
                                     emb_ln_g_ref[...], emb_ln_b_ref[...])

    x = x_scratch[...]                       # (S, H) f32, resident across layers
    kmask = kmask_ref[0]                     # (1, S) additive: 0 valid key, -1e4 padded key

    # ---- fused QKV projection: one [S, 3H] matmul (bf16 operands, f32 accumulate) ----
    qkv = (jnp.dot(x.astype(jnp.bfloat16), qkv_w_ref[0],
                   preferred_element_type=jnp.float32) + qkv_b_ref[0])

    # ---- per-head attention; each head's context lands in its contiguous column slice of
    #      ctx_scratch so the output projection is ONE full-K [S,H]x[H,H] matmul.
    for h in range(NH):
        q_h = qkv[:, h * D:(h + 1) * D]                       # (S, D) — lane-contiguous slice
        k_h = qkv[:, H + h * D:H + (h + 1) * D]
        v_h = qkv[:, 2 * H + h * D:2 * H + (h + 1) * D]
        # contract the head dim of both operands (no explicit K transpose)
        s = lax.dot_general(
            q_h.astype(jnp.bfloat16), k_h.astype(jnp.bfloat16),
            dimension_numbers=(((1,), (1,)), ((), ())),
            preferred_element_type=jnp.float32) * ATTN_SCALE  # (S, S)
        s = s + kmask                                         # key-padding mask (broadcast)
        s = s - jnp.max(s, axis=-1, keepdims=True)
        p = jnp.exp(s)
        p = p * pl.reciprocal(jnp.sum(p, axis=-1, keepdims=True), approx=True)
        ctx_scratch[:, h * D:(h + 1) * D] = jnp.dot(
            p.astype(jnp.bfloat16), v_h.astype(jnp.bfloat16),
            preferred_element_type=jnp.float32)

    attn_out = (jnp.dot(ctx_scratch[...].astype(jnp.bfloat16), attn_w_ref[0],
                        preferred_element_type=jnp.float32) + attn_b_ref[0])

    # ---- residual + LayerNorm (fused, f32) ----
    x = _layer_norm(x + attn_out, ln1_g_ref[0], ln1_b_ref[0])

    # ---- FFN (tanh-approx GELU in f32) + residual + LayerNorm ----
    ff = (jnp.dot(x.astype(jnp.bfloat16), ffn_in_w_ref[0],
                  preferred_element_type=jnp.float32) + ffn_in_b_ref[0])
    ff = jax.nn.gelu(ff, approximate=True)
    ff = (jnp.dot(ff.astype(jnp.bfloat16), ffn_out_w_ref[0],
                  preferred_element_type=jnp.float32) + ffn_out_b_ref[0])
    x = _layer_norm(x + ff, ln2_g_ref[0], ln2_b_ref[0])
    x_scratch[...] = x

    # ---- last layer: BERT pooler (tanh dense) on the [CLS] row only ----
    @pl.when(l == pl.num_programs(1) - 1)
    def _():
        pooled = jnp.tanh(
            jnp.dot(x[0:1, :].astype(jnp.bfloat16), pooler_w_ref[...],
                    preferred_element_type=jnp.float32) + pooler_b_ref[...])
        pooled_ref[0] = pooled.astype(pooled_ref.dtype)


# ------------------------------ parameter setup -------------------------------
def _dense(key, fan_in, fan_out):
    return jax.random.normal(key, (fan_in, fan_out), jnp.float32) * 0.02


def init_params(seed=0):
    key = jax.random.PRNGKey(seed)
    ks = iter(jax.random.split(key, 64))
    L, H, I = N_LAYERS, HIDDEN, INTERMEDIATE
    bf16 = jnp.bfloat16
    p = {
        "word_emb": jax.random.normal(next(ks), (VOCAB, H), jnp.float32) * 0.02,
        "pos_emb": jax.random.normal(next(ks), (MAX_POS, H), jnp.float32) * 0.02,
        "type_emb": jax.random.normal(next(ks), (TYPE_VOCAB, H), jnp.float32) * 0.02,
        "emb_ln_g": jnp.ones((1, H), jnp.float32),
        "emb_ln_b": jnp.zeros((1, H), jnp.float32),
        # stacked per-layer weights, stored bf16 (half the weight DMA; f32 accumulation in-kernel).
        # Q/K/V fused along the output dim -> [H, 3H].
        "qkv_w": jnp.stack([_dense(next(ks), H, 3 * H) for _ in range(L)]).astype(bf16),
        "qkv_b": jnp.zeros((L, 1, 3 * H), jnp.float32),
        "attn_w": jnp.stack([_dense(next(ks), H, H) for _ in range(L)]).astype(bf16),
        "attn_b": jnp.zeros((L, 1, H), jnp.float32),
        "ln1_g": jnp.ones((L, 1, H), jnp.float32),
        "ln1_b": jnp.zeros((L, 1, H), jnp.float32),
        "ffn_in_w": jnp.stack([_dense(next(ks), H, I) for _ in range(L)]).astype(bf16),
        "ffn_in_b": jnp.zeros((L, 1, I), jnp.float32),
        "ffn_out_w": jnp.stack([_dense(next(ks), I, H) for _ in range(L)]).astype(bf16),
        "ffn_out_b": jnp.zeros((L, 1, H), jnp.float32),
        "ln2_g": jnp.ones((L, 1, H), jnp.float32),
        "ln2_b": jnp.zeros((L, 1, H), jnp.float32),
        # pooler + task heads (heads are tiny and stay in XLA)
        "pooler_w": _dense(next(ks), H, H).astype(bf16),
        "pooler_b": jnp.zeros((1, H), jnp.float32),
        "sentiment_w": _dense(next(ks), H, N_SENTIMENT_CLASSES),
        "sentiment_b": jnp.zeros((N_SENTIMENT_CLASSES,), jnp.float32),
        "paraphrase_w": _dense(next(ks), 2 * H, 1),
        "paraphrase_b": jnp.zeros((1,), jnp.float32),
        "similarity_w": _dense(next(ks), 2 * H, 1),
        "similarity_b": jnp.zeros((1,), jnp.float32),
    }
    return p


# ------------------------------- model forward --------------------------------
def bert_pooled_output(params, input_ids, attention_mask):
    """Equivalent of MultitaskBERT.forward: returns the BERT 'pooler_output' [B, H]."""
    B, S = input_ids.shape
    H, I, L = HIDDEN, INTERMEDIATE, N_LAYERS

    # Embedding lookup (gather) stays in XLA; everything downstream is one fused pallas_call.
    emb = (jnp.take(params["word_emb"], input_ids, axis=0)
           + params["pos_emb"][None, :S, :]
           + params["type_emb"][0][None, None, :]).astype(jnp.float32)        # (B, S, H)

    # Tiny additive key-padding mask, (B, 1, S): 0 for attendable keys, -1e4 for padded keys.
    # (No (B*S)^2 mask and no cross-sentence masking is needed: attention is per-sentence.)
    kmask = jnp.where(attention_mask.astype(bool), 0.0, NEG_INF)[:, None, :].astype(jnp.float32)

    layer_spec = lambda shape: pl.BlockSpec(shape, lambda b, l: (l, 0, 0))
    shared2d = lambda shape: pl.BlockSpec(shape, lambda b, l: (0, 0))

    pooled = pl.pallas_call(
        _encoder_kernel,
        out_shape=jax.ShapeDtypeStruct((B, 1, H), jnp.float32),
        grid_spec=pltpu.PrefetchScalarGridSpec(
            num_scalar_prefetch=0,
            grid=(B, L),                                         # (sentence, layer)
            in_specs=[
                pl.BlockSpec((1, S, H), lambda b, l: (b, 0, 0)),  # embeddings (one sentence)
                pl.BlockSpec((1, 1, S), lambda b, l: (b, 0, 0)),  # additive key mask
                shared2d((1, H)),                                 # emb LN gamma
                shared2d((1, H)),                                 # emb LN beta
                layer_spec((1, H, 3 * H)),                        # qkv_w   (layer l)
                layer_spec((1, 1, 3 * H)),                        # qkv_b
                layer_spec((1, H, H)),                            # attn_w
                layer_spec((1, 1, H)),                            # attn_b
                layer_spec((1, 1, H)),                            # ln1_g
                layer_spec((1, 1, H)),                            # ln1_b
                layer_spec((1, H, I)),                            # ffn_in_w
                layer_spec((1, 1, I)),                            # ffn_in_b
                layer_spec((1, I, H)),                            # ffn_out_w
                layer_spec((1, 1, H)),                            # ffn_out_b
                layer_spec((1, 1, H)),                            # ln2_g
                layer_spec((1, 1, H)),                            # ln2_b
                shared2d((H, H)),                                 # pooler_w
                shared2d((1, H)),                                 # pooler_b
            ],
            out_specs=pl.BlockSpec((1, 1, H), lambda b, l: (b, 0, 0)),
            scratch_shapes=[pltpu.VMEM((S, H), jnp.float32),      # activation carry
                            pltpu.VMEM((S, H), jnp.float32)],     # per-head context slab
        ),
        compiler_params=pltpu.CompilerParams(
            dimension_semantics=("parallel", "arbitrary"),        # batch across TCs on v7x
            vmem_limit_bytes=48 * 1024 * 1024,                    # fits v7x's 64 MiB VMEM
        ),
    )(emb, kmask,
      params["emb_ln_g"], params["emb_ln_b"],
      params["qkv_w"], params["qkv_b"],
      params["attn_w"], params["attn_b"],
      params["ln1_g"], params["ln1_b"],
      params["ffn_in_w"], params["ffn_in_b"],
      params["ffn_out_w"], params["ffn_out_b"],
      params["ln2_g"], params["ln2_b"],
      params["pooler_w"], params["pooler_b"])

    return pooled.reshape(B, H)                                   # [CLS] pooler output


# Dropout is the identity in eval mode (matches module.eval()); training-mode dropout
# is intentionally not applied here.
def predict_sentiment(params, input_ids, attention_mask):
    pooled = bert_pooled_output(params, input_ids, attention_mask)
    # 5-wide head: trivial, kept in XLA (a sub-128 last dim would only add masked stores).
    return pooled @ params["sentiment_w"] + params["sentiment_b"]               # [B, 5]


def _pair_logit(params, w_key, b_key, ids1, mask1, ids2, mask2):
    B = ids1.shape[0]
    # One encoder pass for both sides of the pair (doubles the "parallel" sentence axis).
    ids = jnp.concatenate([ids1, ids2], axis=0)                   # [2B, S]
    masks = jnp.concatenate([mask1, mask2], axis=0)
    pooled = bert_pooled_output(params, ids, masks)               # [2B, H]
    e1, e2 = pooled[:B], pooled[B:]
    w = params[w_key]                                             # [2H, 1]
    # Split the classifier weight instead of concatenating embeddings:
    # cat(e1, e2) @ W == e1 @ W[:H] + e2 @ W[H:].
    logit = e1 @ w[:HIDDEN] + e2 @ w[HIDDEN:] + params[b_key]
    return jnp.squeeze(logit, axis=-1)                            # [B]


def predict_paraphrase(params, ids1, mask1, ids2, mask2):
    return _pair_logit(params, "paraphrase_w", "paraphrase_b", ids1, mask1, ids2, mask2)


def predict_similarity(params, ids1, mask1, ids2, mask2):
    return _pair_logit(params, "similarity_w", "similarity_b", ids1, mask1, ids2, mask2)


# ------------------------- pure-JAX reference (f32) ----------------------------
def _ref_pooled(params, input_ids, attention_mask):
    B, S = input_ids.shape
    H, NH, D = HIDDEN, N_HEADS, HEAD_DIM

    def ln(x, g, b):
        mu = jnp.mean(x, axis=-1, keepdims=True)
        var = jnp.mean(jnp.square(x - mu), axis=-1, keepdims=True)
        return (x - mu) * lax.rsqrt(var + LN_EPS) * g + b

    emb = (jnp.take(params["word_emb"], input_ids, axis=0)
           + params["pos_emb"][None, :S, :]
           + params["type_emb"][0][None, None, :]).astype(jnp.float32)
    x = ln(emb, params["emb_ln_g"], params["emb_ln_b"])
    addm = jnp.where(attention_mask.astype(bool), 0.0, NEG_INF)[:, None, None, :]
    for l in range(N_LAYERS):
        qkv = x @ params["qkv_w"][l].astype(jnp.float32) + params["qkv_b"][l]
        q, k, v = jnp.split(qkv, 3, axis=-1)
        q = q.reshape(B, S, NH, D).transpose(0, 2, 1, 3)
        k = k.reshape(B, S, NH, D).transpose(0, 2, 1, 3)
        v = v.reshape(B, S, NH, D).transpose(0, 2, 1, 3)
        s = jnp.einsum("bhqd,bhkd->bhqk", q, k) * ATTN_SCALE + addm
        p = jax.nn.softmax(s, axis=-1)
        ctx = jnp.einsum("bhqk,bhkd->bhqd", p, v).transpose(0, 2, 1, 3).reshape(B, S, H)
        attn_out = ctx @ params["attn_w"][l].astype(jnp.float32) + params["attn_b"][l]
        x = ln(x + attn_out, params["ln1_g"][l], params["ln1_b"][l])
        ff = x @ params["ffn_in_w"][l].astype(jnp.float32) + params["ffn_in_b"][l]
        ff = jax.nn.gelu(ff, approximate=True)
        ff = ff @ params["ffn_out_w"][l].astype(jnp.float32) + params["ffn_out_b"][l]
        x = ln(x + ff, params["ln2_g"][l], params["ln2_b"][l])
    return jnp.tanh(x[:, 0, :] @ params["pooler_w"].astype(jnp.float32) + params["pooler_b"])


# ------------------------------------ main -------------------------------------
if __name__ == "__main__":
    B, S = 2, 8
    params = init_params(seed=0)

    key = jax.random.PRNGKey(0)
    k1, k2 = jax.random.split(key)
    ids1 = jax.random.randint(k1, (B, S), 0, VOCAB, dtype=jnp.int32)
    ids2 = jax.random.randint(k2, (B, S), 0, VOCAB, dtype=jnp.int32)
    mask1 = jnp.ones((B, S), jnp.int32).at[1, S - 2:].set(0)   # last 2 tokens of row 1 padded
    mask2 = jnp.ones((B, S), jnp.int32).at[0, S - 3:].set(0)   # last 3 tokens of row 0 padded

    sent_logits = jax.jit(predict_sentiment)(params, ids1, mask1)
    para_logit = jax.jit(predict_paraphrase)(params, ids1, mask1, ids2, mask2)
    sim_logit = jax.jit(predict_similarity)(params, ids1, mask1, ids2, mask2)
    jax.block_until_ready((sent_logits, para_logit, sim_logit))

    assert sent_logits.shape == (B, N_SENTIMENT_CLASSES)
    assert para_logit.shape == (B,)
    assert sim_logit.shape == (B,)
    assert bool(jnp.all(jnp.isfinite(sent_logits)))
    assert bool(jnp.all(jnp.isfinite(para_logit)))
    assert bool(jnp.all(jnp.isfinite(sim_logit)))

    # Numerical sanity vs. an f32 pure-JAX reference (kernel uses bf16 MXU operands and an
    # approx-reciprocal softmax, so the tolerance is loose but meaningful for tanh outputs).
    got = jax.jit(bert_pooled_output)(params, ids1, mask1)
    ref = _ref_pooled(params, ids1, mask1)
    assert bool(jnp.allclose(got, ref, atol=0.1)), float(jnp.max(jnp.abs(got - ref)))

    print("KERNEL_OK")
</pallas_src>

<mosaic_0001>
module attributes {stable_mosaic.version = 11 : i64} {
  func.func @_encoder_kernel(%arg0: i32, %arg1: i32, %arg2: memref<1x8x32xf32, #tpu.memory_space<vmem>>, %arg3: memref<1x1x8xf32, #tpu.memory_space<vmem>>, %arg4: memref<1x32xf32, #tpu.memory_space<vmem>>, %arg5: memref<1x32xf32, #tpu.memory_space<vmem>>, %arg6: memref<1x32x96xbf16, #tpu.memory_space<vmem>>, %arg7: memref<1x1x96xf32, #tpu.memory_space<vmem>>, %arg8: memref<1x32x32xbf16, #tpu.memory_space<vmem>>, %arg9: memref<1x1x32xf32, #tpu.memory_space<vmem>>, %arg10: memref<1x1x32xf32, #tpu.memory_space<vmem>>, %arg11: memref<1x1x32xf32, #tpu.memory_space<vmem>>, %arg12: memref<1x32x64xbf16, #tpu.memory_space<vmem>>, %arg13: memref<1x1x64xf32, #tpu.memory_space<vmem>>, %arg14: memref<1x64x32xbf16, #tpu.memory_space<vmem>>, %arg15: memref<1x1x32xf32, #tpu.memory_space<vmem>>, %arg16: memref<1x1x32xf32, #tpu.memory_space<vmem>>, %arg17: memref<1x1x32xf32, #tpu.memory_space<vmem>>, %arg18: memref<32x32xbf16, #tpu.memory_space<vmem>>, %arg19: memref<1x32xf32, #tpu.memory_space<vmem>>, %arg20: memref<1x1x32xf32, #tpu.memory_space<vmem>>, %arg21: memref<8x32xf32, #tpu.memory_space<vmem>>, %arg22: memref<8x32xf32, #tpu.memory_space<vmem>>) attributes {dimension_semantics = [#tpu.dimension_semantics<parallel>, #tpu.dimension_semantics<arbitrary>], iteration_bounds = array<i64: 2, 2>, scalar_prefetch = 0 : i64, scratch_operands = 2 : i64, tpu.core_type = #tpu.core_type<tc>, window_params = [{transform_indices = @transform_0, window_bounds = array<i64: 1, 8, 32>}, {transform_indices = @transform_1, window_bounds = array<i64: 1, 1, 8>}, {pipeline_mode = #tpu.pipeline_mode<synchronous>, transform_indices = @transform_2, window_bounds = array<i64: 1, 32>}, {pipeline_mode = #tpu.pipeline_mode<synchronous>, transform_indices = @transform_3, window_bounds = array<i64: 1, 32>}, {transform_indices = @transform_4, window_bounds = array<i64: 1, 32, 96>}, {transform_indices = @transform_5, window_bounds = array<i64: 1, 1, 96>}, {transform_indices = @transform_6, window_bounds = array<i64: 1, 32, 32>}, {transform_indices = @transform_7, window_bounds = array<i64: 1, 1, 32>}, {transform_indices = @transform_8, window_bounds = array<i64: 1, 1, 32>}, {transform_indices = @transform_9, window_bounds = array<i64: 1, 1, 32>}, {transform_indices = @transform_10, window_bounds = array<i64: 1, 32, 64>}, {transform_indices = @transform_11, window_bounds = array<i64: 1, 1, 64>}, {transform_indices = @transform_12, window_bounds = array<i64: 1, 64, 32>}, {transform_indices = @transform_13, window_bounds = array<i64: 1, 1, 32>}, {transform_indices = @transform_14, window_bounds = array<i64: 1, 1, 32>}, {transform_indices = @transform_15, window_bounds = array<i64: 1, 1, 32>}, {pipeline_mode = #tpu.pipeline_mode<synchronous>, transform_indices = @transform_16, window_bounds = array<i64: 32, 32>}, {pipeline_mode = #tpu.pipeline_mode<synchronous>, transform_indices = @transform_17, window_bounds = array<i64: 1, 32>}, {transform_indices = @transform_18, window_bounds = array<i64: 1, 1, 32>}]} {
    %c0_i32 = arith.constant 0 : i32
    %0 = arith.cmpi eq, %arg1, %c0_i32 : i32
    %1 = arith.extui %0 : i1 to i32
    %c0_i32_0 = arith.constant 0 : i32
    %2 = arith.cmpi ne, %1, %c0_i32_0 : i32
    scf.if %2 {
      %c0_76 = arith.constant 0 : index
      %c0_77 = arith.constant 0 : index
      %c0_78 = arith.constant 0 : index
      %158 = vector.load %arg2[%c0_76, %c0_77, %c0_78] : memref<1x8x32xf32, #tpu.memory_space<vmem>>, vector<1x8x32xf32>
      %159 = vector.shape_cast %158 : vector<1x8x32xf32> to vector<8x32xf32>
      %c0_79 = arith.constant 0 : index
      %c0_80 = arith.constant 0 : index
      %160 = vector.load %arg4[%c0_79, %c0_80] : memref<1x32xf32, #tpu.memory_space<vmem>>, vector<1x32xf32>
      %c0_81 = arith.constant 0 : index
      %c0_82 = arith.constant 0 : index
      %161 = vector.load %arg5[%c0_81, %c0_82] : memref<1x32xf32, #tpu.memory_space<vmem>>, vector<1x32xf32>
      %cst_83 = arith.constant dense<0.000000e+00> : vector<8xf32>
      %162 = vector.multi_reduction <add>, %159, %cst_83 [1] : vector<8x32xf32> to vector<8xf32>
      %163 = vector.shape_cast %162 : vector<8xf32> to vector<8x1xf32>
      %cst_84 = arith.constant 3.200000e+01 : f32
      %164 = vector.broadcast %cst_84 : f32 to vector<8x1xf32>
      %165 = arith.divf %163, %164 : vector<8x1xf32>
      %166 = vector.broadcast %165 : vector<8x1xf32> to vector<8x32xf32>
      %167 = arith.subf %159, %166 : vector<8x32xf32>
      %168 = arith.mulf %167, %167 : vector<8x32xf32>
      %cst_85 = arith.constant dense<0.000000e+00> : vector<8xf32>
      %169 = vector.multi_reduction <add>, %168, %cst_85 [1] : vector<8x32xf32> to vector<8xf32>
      %170 = vector.shape_cast %169 : vector<8xf32> to vector<8x1xf32>
      %cst_86 = arith.constant 3.200000e+01 : f32
      %171 = vector.broadcast %cst_86 : f32 to vector<8x1xf32>
      %172 = arith.divf %170, %171 : vector<8x1xf32>
      %173 = vector.broadcast %165 : vector<8x1xf32> to vector<8x32xf32>
      %174 = arith.subf %159, %173 : vector<8x32xf32>
      %cst_87 = arith.constant 9.99999996E-13 : f32
      %175 = vector.broadcast %cst_87 : f32 to vector<8x1xf32>
      %176 = arith.addf %172, %175 : vector<8x1xf32>
      %177 = math.rsqrt %176 : vector<8x1xf32>
      %178 = vector.broadcast %177 : vector<8x1xf32> to vector<8x32xf32>
      %179 = arith.mulf %174, %178 : vector<8x32xf32>
      %180 = vector.broadcast %160 : vector<1x32xf32> to vector<8x32xf32>
      %181 = arith.mulf %179, %180 : vector<8x32xf32>
      %182 = vector.broadcast %161 : vector<1x32xf32> to vector<8x32xf32>
      %183 = arith.addf %181, %182 : vector<8x32xf32>
      %c0_88 = arith.constant 0 : index
      %c0_89 = arith.constant 0 : index
      %184 = vector.load %arg21[%c0_88, %c0_89] : memref<8x32xf32, #tpu.memory_space<vmem>>, vector<8x32xf32>
      tpu.vector_store %arg21[%c0_88, %c0_89], %183 {strides = array<i32>} : memref<8x32xf32, #tpu.memory_space<vmem>>, vector<8x32xf32>,
    } else {
    }
    %c0 = arith.constant 0 : index
    %c0_1 = arith.constant 0 : index
    %3 = vector.load %arg21[%c0, %c0_1] : memref<8x32xf32, #tpu.memory_space<vmem>>, vector<8x32xf32>
    %c0_2 = arith.constant 0 : index
    %c0_3 = arith.constant 0 : index
    %c0_4 = arith.constant 0 : index
    %4 = vector.load %arg3[%c0_2, %c0_3, %c0_4] : memref<1x1x8xf32, #tpu.memory_space<vmem>>, vector<1x1x8xf32>
    %5 = vector.shape_cast %4 : vector<1x1x8xf32> to vector<1x8xf32>
    %6 = arith.truncf %3 : vector<8x32xf32> to vector<8x32xbf16>
    %c0_5 = arith.constant 0 : index
    %c0_6 = arith.constant 0 : index
    %c0_7 = arith.constant 0 : index
    %7 = vector.load %arg6[%c0_5, %c0_6, %c0_7] : memref<1x32x96xbf16, #tpu.memory_space<vmem>>, vector<1x32x96xbf16>
    %8 = vector.shape_cast %7 : vector<1x32x96xbf16> to vector<32x96xbf16>
    %cst = arith.constant dense<0.000000e+00> : vector<8x96xf32>
    %9 = tpu.matmul %6, %8, %cst {dimension_numbers = #tpu.dot_dimension_numbers<[1], [0], [0], [1], [0, 0, 1, 1], [], []>} : vector<8x32xbf16>, vector<32x96xbf16>, vector<8x96xf32> -> vector<8x96xf32>
    %c0_8 = arith.constant 0 : index
    %c0_9 = arith.constant 0 : index
    %c0_10 = arith.constant 0 : index
    %10 = vector.load %arg7[%c0_8, %c0_9, %c0_10] : memref<1x1x96xf32, #tpu.memory_space<vmem>>, vector<1x1x96xf32>
    %11 = vector.shape_cast %10 : vector<1x1x96xf32> to vector<1x96xf32>
    %12 = vector.broadcast %11 : vector<1x96xf32> to vector<8x96xf32>
    %13 = arith.addf %9, %12 : vector<8x96xf32>
    %14 = vector.extract_strided_slice %13 {offsets = [0, 0], sizes = [8, 16], strides = [1, 1]} : vector<8x96xf32> to vector<8x16xf32>
    %15 = vector.extract_strided_slice %13 {offsets = [0, 32], sizes = [8, 16], strides = [1, 1]} : vector<8x96xf32> to vector<8x16xf32>
    %16 = vector.extract_strided_slice %13 {offsets = [0, 64], sizes = [8, 16], strides = [1, 1]} : vector<8x96xf32> to vector<8x16xf32>
    %17 = arith.truncf %14 : vector<8x16xf32> to vector<8x16xbf16>
    %18 = arith.truncf %15 : vector<8x16xf32> to vector<8x16xbf16>
    %cst_11 = arith.constant dense<0.000000e+00> : vector<8x8xf32>
    %19 = tpu.matmul %17, %18, %cst_11 {dimension_numbers = #tpu.dot_dimension_numbers<[1], [1], [0], [0], [0, 0, 1, 0], [], []>} : vector<8x16xbf16>, vector<8x16xbf16>, vector<8x8xf32> -> vector<8x8xf32>
    %cst_12 = arith.constant 2.500000e-01 : f32
    %20 = vector.broadcast %cst_12 : f32 to vector<8x8xf32>
    %21 = arith.mulf %19, %20 : vector<8x8xf32>
    %22 = vector.broadcast %5 : vector<1x8xf32> to vector<8x8xf32>
    %23 = arith.addf %21, %22 : vector<8x8xf32>
    %cst_13 = arith.constant dense<0xFF800000> : vector<8xf32>
    %24 = vector.multi_reduction <maximumf>, %23, %cst_13 [1] : vector<8x8xf32> to vector<8xf32>
    %25 = vector.shape_cast %24 : vector<8xf32> to vector<8x1xf32>
    %26 = vector.broadcast %25 : vector<8x1xf32> to vector<8x8xf32>
    %27 = arith.subf %23, %26 : vector<8x8xf32>
    %28 = math.exp %27 : vector<8x8xf32>
    %cst_14 = arith.constant dense<0.000000e+00> : vector<8xf32>
    %29 = vector.multi_reduction <add>, %28, %cst_14 [1] : vector<8x8xf32> to vector<8xf32>
    %30 = vector.shape_cast %29 : vector<8xf32> to vector<8x1xf32>
    %31 = tpu.reciprocal %30 {approx = true} : vector<8x1xf32> -> vector<8x1xf32>
    %32 = vector.broadcast %31 : vector<8x1xf32> to vector<8x8xf32>
    %33 = arith.mulf %28, %32 : vector<8x8xf32>
    %34 = arith.truncf %33 : vector<8x8xf32> to vector<8x8xbf16>
    %35 = arith.truncf %16 : vector<8x16xf32> to vector<8x16xbf16>
    %cst_15 = arith.constant dense<0.000000e+00> : vector<8x16xf32>
    %36 = tpu.matmul %34, %35, %cst_15 {dimension_numbers = #tpu.dot_dimension_numbers<[1], [0], [0], [1], [0, 0, 1, 1], [], []>} : vector<8x8xbf16>, vector<8x16xbf16>, vector<8x16xf32> -> vector<8x16xf32>
    %c0_16 = arith.constant 0 : index
    %c0_17 = arith.constant 0 : index
    %37 = vector.load %arg22[%c0_16, %c0_17] : memref<8x32xf32, #tpu.memory_space<vmem>>, vector<8x16xf32>
    tpu.vector_store %arg22[%c0_16, %c0_17], %36 {strides = array<i32>} : memref<8x32xf32, #tpu.memory_space<vmem>>, vector<8x16xf32>,
    %38 = vector.extract_strided_slice %13 {offsets = [0, 16], sizes = [8, 16], strides = [1, 1]} : vector<8x96xf32> to vector<8x16xf32>
    %39 = vector.extract_strided_slice %13 {offsets = [0, 48], sizes = [8, 16], strides = [1, 1]} : vector<8x96xf32> to vector<8x16xf32>
    %40 = vector.extract_strided_slice %13 {offsets = [0, 80], sizes = [8, 16], strides = [1, 1]} : vector<8x96xf32> to vector<8x16xf32>
    %41 = arith.truncf %38 : vector<8x16xf32> to vector<8x16xbf16>
    %42 = arith.truncf %39 : vector<8x16xf32> to vector<8x16xbf16>
    %cst_18 = arith.constant dense<0.000000e+00> : vector<8x8xf32>
    %43 = tpu.matmul %41, %42, %cst_18 {dimension_numbers = #tpu.dot_dimension_numbers<[1], [1], [0], [0], [0, 0, 1, 0], [], []>} : vector<8x16xbf16>, vector<8x16xbf16>, vector<8x8xf32> -> vector<8x8xf32>
    %cst_19 = arith.constant 2.500000e-01 : f32
    %44 = vector.broadcast %cst_19 : f32 to vector<8x8xf32>
    %45 = arith.mulf %43, %44 : vector<8x8xf32>
    %46 = vector.broadcast %5 : vector<1x8xf32> to vector<8x8xf32>
    %47 = arith.addf %45, %46 : vector<8x8xf32>
    %cst_20 = arith.constant dense<0xFF800000> : vector<8xf32>
    %48 = vector.multi_reduction <maximumf>, %47, %cst_20 [1] : vector<8x8xf32> to vector<8xf32>
    %49 = vector.shape_cast %48 : vector<8xf32> to vector<8x1xf32>
    %50 = vector.broadcast %49 : vector<8x1xf32> to vector<8x8xf32>
    %51 = arith.subf %47, %50 : vector<8x8xf32>
    %52 = math.exp %51 : vector<8x8xf32>
    %cst_21 = arith.constant dense<0.000000e+00> : vector<8xf32>
    %53 = vector.multi_reduction <add>, %52, %cst_21 [1] : vector<8x8xf32> to vector<8xf32>
    %54 = vector.shape_cast %53 : vector<8xf32> to vector<8x1xf32>
    %55 = tpu.reciprocal %54 {approx = true} : vector<8x1xf32> -> vector<8x1xf32>
    %56 = vector.broadcast %55 : vector<8x1xf32> to vector<8x8xf32>
    %57 = arith.mulf %52, %56 : vector<8x8xf32>
    %58 = arith.truncf %57 : vector<8x8xf32> to vector<8x8xbf16>
    %59 = arith.truncf %40 : vector<8x16xf32> to vector<8x16xbf16>
    %cst_22 = arith.constant dense<0.000000e+00> : vector<8x16xf32>
    %60 = tpu.matmul %58, %59, %cst_22 {dimension_numbers = #tpu.dot_dimension_numbers<[1], [0], [0], [1], [0, 0, 1, 1], [], []>} : vector<8x8xbf16>, vector<8x16xbf16>, vector<8x16xf32> -> vector<8x16xf32>
    %c0_23 = arith.constant 0 : index
    %c16 = arith.constant 16 : index
    %61 = vector.load %arg22[%c0_23, %c16] : memref<8x32xf32, #tpu.memory_space<vmem>>, vector<8x16xf32>
    tpu.vector_store %arg22[%c0_23, %c16], %60 {strides = array<i32>} : memref<8x32xf32, #tpu.memory_space<vmem>>, vector<8x16xf32>,
    %c0_24 = arith.constant 0 : index
    %c0_25 = arith.constant 0 : index
    %62 = vector.load %arg22[%c0_24, %c0_25] : memref<8x32xf32, #tpu.memory_space<vmem>>, vector<8x32xf32>
    %63 = arith.truncf %62 : vector<8x32xf32> to vector<8x32xbf16>
    %c0_26 = arith.constant 0 : index
    %c0_27 = arith.constant 0 : index
    %c0_28 = arith.constant 0 : index
    %64 = vector.load %arg8[%c0_26, %c0_27, %c0_28] : memref<1x32x32xbf16, #tpu.memory_space<vmem>>, vector<1x32x32xbf16>
    %65 = vector.shape_cast %64 : vector<1x32x32xbf16> to vector<32x32xbf16>
    %cst_29 = arith.constant dense<0.000000e+00> : vector<8x32xf32>
    %66 = tpu.matmul %63, %65, %cst_29 {dimension_numbers = #tpu.dot_dimension_numbers<[1], [0], [0], [1], [0, 0, 1, 1], [], []>} : vector<8x32xbf16>, vector<32x32xbf16>, vector<8x32xf32> -> vector<8x32xf32>
    %c0_30 = arith.constant 0 : index
    %c0_31 = arith.constant 0 : index
    %c0_32 = arith.constant 0 : index
    %67 = vector.load %arg9[%c0_30, %c0_31, %c0_32] : memref<1x1x32xf32, #tpu.memory_space<vmem>>, vector<1x1x32xf32>
    %68 = vector.shape_cast %67 : vector<1x1x32xf32> to vector<1x32xf32>
    %69 = vector.broadcast %68 : vector<1x32xf32> to vector<8x32xf32>
    %70 = arith.addf %66, %69 : vector<8x32xf32>
    %71 = arith.addf %3, %70 : vector<8x32xf32>
    %c0_33 = arith.constant 0 : index
    %c0_34 = arith.constant 0 : index
    %c0_35 = arith.constant 0 : index
    %72 = vector.load %arg10[%c0_33, %c0_34, %c0_35] : memref<1x1x32xf32, #tpu.memory_space<vmem>>, vector<1x1x32xf32>
    %73 = vector.shape_cast %72 : vector<1x1x32xf32> to vector<1x32xf32>
    %c0_36 = arith.constant 0 : index
    %c0_37 = arith.constant 0 : index
    %c0_38 = arith.constant 0 : index
    %74 = vector.load %arg11[%c0_36, %c0_37, %c0_38] : memref<1x1x32xf32, #tpu.memory_space<vmem>>, vector<1x1x32xf32>
    %75 = vector.shape_cast %74 : vector<1x1x32xf32> to vector<1x32xf32>
    %cst_39 = arith.constant dense<0.000000e+00> : vector<8xf32>
    %76 = vector.multi_reduction <add>, %71, %cst_39 [1] : vector<8x32xf32> to vector<8xf32>
    %77 = vector.shape_cast %76 : vector<8xf32> to vector<8x1xf32>
    %cst_40 = arith.constant 3.200000e+01 : f32
    %78 = vector.broadcast %cst_40 : f32 to vector<8x1xf32>
    %79 = arith.divf %77, %78 : vector<8x1xf32>
    %80 = vector.broadcast %79 : vector<8x1xf32> to vector<8x32xf32>
    %81 = arith.subf %71, %80 : vector<8x32xf32>
    %82 = arith.mulf %81, %81 : vector<8x32xf32>
    %cst_41 = arith.constant dense<0.000000e+00> : vector<8xf32>
    %83 = vector.multi_reduction <add>, %82, %cst_41 [1] : vector<8x32xf32> to vector<8xf32>
    %84 = vector.shape_cast %83 : vector<8xf32> to vector<8x1xf32>
    %cst_42 = arith.constant 3.200000e+01 : f32
    %85 = vector.broadcast %cst_42 : f32 to vector<8x1xf32>
    %86 = arith.divf %84, %85 : vector<8x1xf32>
    %87 = vector.broadcast %79 : vector<8x1xf32> to vector<8x32xf32>
    %88 = arith.subf %71, %87 : vector<8x32xf32>
    %cst_43 = arith.constant 9.99999996E-13 : f32
    %89 = vector.broadcast %cst_43 : f32 to vector<8x1xf32>
    %90 = arith.addf %86, %89 : vector<8x1xf32>
    %91 = math.rsqrt %90 : vector<8x1xf32>
    %92 = vector.broadcast %91 : vector<8x1xf32> to vector<8x32xf32>
    %93 = arith.mulf %88, %92 : vector<8x32xf32>
    %94 = vector.broadcast %73 : vector<1x32xf32> to vector<8x32xf32>
    %95 = arith.mulf %93, %94 : vector<8x32xf32>
    %96 = vector.broadcast %75 : vector<1x32xf32> to vector<8x32xf32>
    %97 = arith.addf %95, %96 : vector<8x32xf32>
    %98 = arith.truncf %97 : vector<8x32xf32> to vector<8x32xbf16>
    %c0_44 = arith.constant 0 : index
    %c0_45 = arith.constant 0 : index
    %c0_46 = arith.constant 0 : index
    %99 = vector.load %arg12[%c0_44, %c0_45, %c0_46] : memref<1x32x64xbf16, #tpu.memory_space<vmem>>, vector<1x32x64xbf16>
    %100 = vector.shape_cast %99 : vector<1x32x64xbf16> to vector<32x64xbf16>
    %cst_47 = arith.constant dense<0.000000e+00> : vector<8x64xf32>
    %101 = tpu.matmul %98, %100, %cst_47 {dimension_numbers = #tpu.dot_dimension_numbers<[1], [0], [0], [1], [0, 0, 1, 1], [], []>} : vector<8x32xbf16>, vector<32x64xbf16>, vector<8x64xf32> -> vector<8x64xf32>
    %c0_48 = arith.constant 0 : index
    %c0_49 = arith.constant 0 : index
    %c0_50 = arith.constant 0 : index
    %102 = vector.load %arg13[%c0_48, %c0_49, %c0_50] : memref<1x1x64xf32, #tpu.memory_space<vmem>>, vector<1x1x64xf32>
    %103 = vector.shape_cast %102 : vector<1x1x64xf32> to vector<1x64xf32>
    %104 = vector.broadcast %103 : vector<1x64xf32> to vector<8x64xf32>
    %105 = arith.addf %101, %104 : vector<8x64xf32>
    %106 = arith.mulf %105, %105 : vector<8x64xf32>
    %107 = arith.mulf %105, %106 : vector<8x64xf32>
    %cst_51 = arith.constant 4.471500e-02 : f32
    %108 = vector.broadcast %cst_51 : f32 to vector<8x64xf32>
    %109 = arith.mulf %108, %107 : vector<8x64xf32>
    %110 = arith.addf %105, %109 : vector<8x64xf32>
    %cst_52 = arith.constant 0.797884583 : f32
    %111 = vector.broadcast %cst_52 : f32 to vector<8x64xf32>
    %112 = arith.mulf %111, %110 : vector<8x64xf32>
    %113 = math.tanh %112 : vector<8x64xf32>
    %cst_53 = arith.constant 1.000000e+00 : f32
    %114 = vector.broadcast %cst_53 : f32 to vector<8x64xf32>
    %115 = arith.addf %114, %113 : vector<8x64xf32>
    %cst_54 = arith.constant 5.000000e-01 : f32
    %116 = vector.broadcast %cst_54 : f32 to vector<8x64xf32>
    %117 = arith.mulf %116, %115 : vector<8x64xf32>
    %118 = arith.mulf %105, %117 : vector<8x64xf32>
    %119 = arith.truncf %118 : vector<8x64xf32> to vector<8x64xbf16>
    %c0_55 = arith.constant 0 : index
    %c0_56 = arith.constant 0 : index
    %c0_57 = arith.constant 0 : index
    %120 = vector.load %arg14[%c0_55, %c0_56, %c0_57] : memref<1x64x32xbf16, #tpu.memory_space<vmem>>, vector<1x64x32xbf16>
    %121 = vector.shape_cast %120 : vector<1x64x32xbf16> to vector<64x32xbf16>
    %cst_58 = arith.constant dense<0.000000e+00> : vector<8x32xf32>
    %122 = tpu.matmul %119, %121, %cst_58 {dimension_numbers = #tpu.dot_dimension_numbers<[1], [0], [0], [1], [0, 0, 1, 1], [], []>} : vector<8x64xbf16>, vector<64x32xbf16>, vector<8x32xf32> -> vector<8x32xf32>
    %c0_59 = arith.constant 0 : index
    %c0_60 = arith.constant 0 : index
    %c0_61 = arith.constant 0 : index
    %123 = vector.load %arg15[%c0_59, %c0_60, %c0_61] : memref<1x1x32xf32, #tpu.memory_space<vmem>>, vector<1x1x32xf32>
    %124 = vector.shape_cast %123 : vector<1x1x32xf32> to vector<1x32xf32>
    %125 = vector.broadcast %124 : vector<1x32xf32> to vector<8x32xf32>
    %126 = arith.addf %122, %125 : vector<8x32xf32>
    %127 = arith.addf %97, %126 : vector<8x32xf32>
    %c0_62 = arith.constant 0 : index
    %c0_63 = arith.constant 0 : index
    %c0_64 = arith.constant 0 : index
    %128 = vector.load %arg16[%c0_62, %c0_63, %c0_64] : memref<1x1x32xf32, #tpu.memory_space<vmem>>, vector<1x1x32xf32>
    %129 = vector.shape_cast %128 : vector<1x1x32xf32> to vector<1x32xf32>
    %c0_65 = arith.constant 0 : index
    %c0_66 = arith.constant 0 : index
    %c0_67 = arith.constant 0 : index
    %130 = vector.load %arg17[%c0_65, %c0_66, %c0_67] : memref<1x1x32xf32, #tpu.memory_space<vmem>>, vector<1x1x32xf32>
    %131 = vector.shape_cast %130 : vector<1x1x32xf32> to vector<1x32xf32>
    %cst_68 = arith.constant dense<0.000000e+00> : vector<8xf32>
    %132 = vector.multi_reduction <add>, %127, %cst_68 [1] : vector<8x32xf32> to vector<8xf32>
    %133 = vector.shape_cast %132 : vector<8xf32> to vector<8x1xf32>
    %cst_69 = arith.constant 3.200000e+01 : f32
    %134 = vector.broadcast %cst_69 : f32 to vector<8x1xf32>
    %135 = arith.divf %133, %134 : vector<8x1xf32>
    %136 = vector.broadcast %135 : vector<8x1xf32> to vector<8x32xf32>
    %137 = arith.subf %127, %136 : vector<8x32xf32>
    %138 = arith.mulf %137, %137 : vector<8x32xf32>
    %cst_70 = arith.constant dense<0.000000e+00> : vector<8xf32>
    %139 = vector.multi_reduction <add>, %138, %cst_70 [1] : vector<8x32xf32> to vector<8xf32>
    %140 = vector.shape_cast %139 : vector<8xf32> to vector<8x1xf32>
    %cst_71 = arith.constant 3.200000e+01 : f32
    %141 = vector.broadcast %cst_71 : f32 to vector<8x1xf32>
    %142 = arith.divf %140, %141 : vector<8x1xf32>
    %143 = vector.broadcast %135 : vector<8x1xf32> to vector<8x32xf32>
    %144 = arith.subf %127, %143 : vector<8x32xf32>
    %cst_72 = arith.constant 9.99999996E-13 : f32
    %145 = vector.broadcast %cst_72 : f32 to vector<8x1xf32>
    %146 = arith.addf %142, %145 : vector<8x1xf32>
    %147 = math.rsqrt %146 : vector<8x1xf32>
    %148 = vector.broadcast %147 : vector<8x1xf32> to vector<8x32xf32>
    %149 = arith.mulf %144, %148 : vector<8x32xf32>
    %150 = vector.broadcast %129 : vector<1x32xf32> to vector<8x32xf32>
    %151 = arith.mulf %149, %150 : vector<8x32xf32>
    %152 = vector.broadcast %131 : vector<1x32xf32> to vector<8x32xf32>
    %153 = arith.addf %151, %152 : vector<8x32xf32>
    %c0_73 = arith.constant 0 : index
    %c0_74 = arith.constant 0 : index
    %154 = vector.load %arg21[%c0_73, %c0_74] : memref<8x32xf32, #tpu.memory_space<vmem>>, vector<8x32xf32>
    tpu.vector_store %arg21[%c0_73, %c0_74], %153 {strides = array<i32>} : memref<8x32xf32, #tpu.memory_space<vmem>>, vector<8x32xf32>,
    %c1_i32 = arith.constant 1 : i32
    %155 = arith.cmpi eq, %arg1, %c1_i32 : i32
    %156 = arith.extui %155 : i1 to i32
    %c0_i32_75 = arith.constant 0 : i32
    %157 = arith.cmpi ne, %156, %c0_i32_75 : i32
    scf.if %157 {
      %158 = vector.extract_strided_slice %153 {offsets = [0, 0], sizes = [1, 32], strides = [1, 1]} : vector<8x32xf32> to vector<1x32xf32>
      %159 = arith.truncf %158 : vector<1x32xf32> to vector<1x32xbf16>
      %c0_76 = arith.constant 0 : index
      %c0_77 = arith.constant 0 : index
      %160 = vector.load %arg18[%c0_76, %c0_77] : memref<32x32xbf16, #tpu.memory_space<vmem>>, vector<32x32xbf16>
      %cst_78 = arith.constant dense<0.000000e+00> : vector<1x32xf32>
      %161 = tpu.matmul %159, %160, %cst_78 {dimension_numbers = #tpu.dot_dimension_numbers<[1], [0], [0], [1], [0, 0, 1, 1], [], []>} : vector<1x32xbf16>, vector<32x32xbf16>, vector<1x32xf32> -> vector<1x32xf32>
      %c0_79 = arith.constant 0 : index
      %c0_80 = arith.constant 0 : index
      %162 = vector.load %arg19[%c0_79, %c0_80] : memref<1x32xf32, #tpu.memory_space<vmem>>, vector<1x32xf32>
      %163 = arith.addf %161, %162 : vector<1x32xf32>
      %164 = math.tanh %163 : vector<1x32xf32>
      %c0_81 = arith.constant 0 : index
      %c0_82 = arith.constant 0 : index
      %c0_83 = arith.constant 0 : index
      %165 = vector.load %arg20[%c0_81, %c0_82, %c0_83] : memref<1x1x32xf32, #tpu.memory_space<vmem>>, vector<1x1x32xf32>
      %166 = vector.shape_cast %165 : vector<1x1x32xf32> to vector<1x32xf32>
      %167 = vector.shape_cast %164 : vector<1x32xf32> to vector<1x1x32xf32>
      tpu.vector_store %arg20[%c0_81, %c0_82, %c0_83], %167 {strides = array<i32>} : memref<1x1x32xf32, #tpu.memory_space<vmem>>, vector<1x1x32xf32>,
    } else {
    }
    return
  }
  func.func @transform_0(%arg0: i32, %arg1: i32) -> (i32, i32, i32) {
    %c0_i32 = arith.constant 0 : i32
    %c0_i32_0 = arith.constant 0 : i32
    %c0_i32_1 = arith.constant 0 : i32
    return %arg0, %c0_i32, %c0_i32_0 : i32, i32, i32
  }
  func.func @transform_1(%arg0: i32, %arg1: i32) -> (i32, i32, i32) {
    %c0_i32 = arith.constant 0 : i32
    %c0_i32_0 = arith.constant 0 : i32
    %c0_i32_1 = arith.constant 0 : i32
    return %arg0, %c0_i32, %c0_i32_0 : i32, i32, i32
  }
  func.func @transform_2(%arg0: i32, %arg1: i32) -> (i32, i32) {
    %c0_i32 = arith.constant 0 : i32
    %c0_i32_0 = arith.constant 0 : i32
    %c0_i32_1 = arith.constant 0 : i32
    return %c0_i32, %c0_i32_0 : i32, i32
  }
  func.func @transform_3(%arg0: i32, %arg1: i32) -> (i32, i32) {
    %c0_i32 = arith.constant 0 : i32
    %c0_i32_0 = arith.constant 0 : i32
    %c0_i32_1 = arith.constant 0 : i32
    return %c0_i32, %c0_i32_0 : i32, i32
  }
  func.func @transform_4(%arg0: i32, %arg1: i32) -> (i32, i32, i32) {
    %c0_i32 = arith.constant 0 : i32
    %c0_i32_0 = arith.constant 0 : i32
    %c0_i32_1 = arith.constant 0 : i32
    return %arg1, %c0_i32, %c0_i32_0 : i32, i32, i32
  }
  func.func @transform_5(%arg0: i32, %arg1: i32) -> (i32, i32, i32) {
    %c0_i32 = arith.constant 0 : i32
    %c0_i32_0 = arith.constant 0 : i32
    %c0_i32_1 = arith.constant 0 : i32
    return %arg1, %c0_i32, %c0_i32_0 : i32, i32, i32
  }
  func.func @transform_6(%arg0: i32, %arg1: i32) -> (i32, i32, i32) {
    %c0_i32 = arith.constant 0 : i32
    %c0_i32_0 = arith.constant 0 : i32
    %c0_i32_1 = arith.constant 0 : i32
    return %arg1, %c0_i32, %c0_i32_0 : i32, i32, i32
  }
  func.func @transform_7(%arg0: i32, %arg1: i32) -> (i32, i32, i32) {
    %c0_i32 = arith.constant 0 : i32
    %c0_i32_0 = arith.constant 0 : i32
    %c0_i32_1 = arith.constant 0 : i32
    return %arg1, %c0_i32, %c0_i32_0 : i32, i32, i32
  }
  func.func @transform_8(%arg0: i32, %arg1: i32) -> (i32, i32, i32) {
    %c0_i32 = arith.constant 0 : i32
    %c0_i32_0 = arith.constant 0 : i32
    %c0_i32_1 = arith.constant 0 : i32
    return %arg1, %c0_i32, %c0_i32_0 : i32, i32, i32
  }
  func.func @transform_9(%arg0: i32, %arg1: i32) -> (i32, i32, i32) {
    %c0_i32 = arith.constant 0 : i32
    %c0_i32_0 = arith.constant 0 : i32
    %c0_i32_1 = arith.constant 0 : i32
    return %arg1, %c0_i32, %c0_i32_0 : i32, i32, i32
  }
  func.func @transform_10(%arg0: i32, %arg1: i32) -> (i32, i32, i32) {
    %c0_i32 = arith.constant 0 : i32
    %c0_i32_0 = arith.constant 0 : i32
    %c0_i32_1 = arith.constant 0 : i32
    return %arg1, %c0_i32, %c0_i32_0 : i32, i32, i32
  }
  func.func @transform_11(%arg0: i32, %arg1: i32) -> (i32, i32, i32) {
    %c0_i32 = arith.constant 0 : i32
    %c0_i32_0 = arith.constant 0 : i32
    %c0_i32_1 = arith.constant 0 : i32
    return %arg1, %c0_i32, %c0_i32_0 : i32, i32, i32
  }
  func.func @transform_12(%arg0: i32, %arg1: i32) -> (i32, i32, i32) {
    %c0_i32 = arith.constant 0 : i32
    %c0_i32_0 = arith.constant 0 : i32
    %c0_i32_1 = arith.constant 0 : i32
    return %arg1, %c0_i32, %c0_i32_0 : i32, i32, i32
  }
  func.func @transform_13(%arg0: i32, %arg1: i32) -> (i32, i32, i32) {
    %c0_i32 = arith.constant 0 : i32
    %c0_i32_0 = arith.constant 0 : i32
    %c0_i32_1 = arith.constant 0 : i32
    return %arg1, %c0_i32, %c0_i32_0 : i32, i32, i32
  }
  func.func @transform_14(%arg0: i32, %arg1: i32) -> (i32, i32, i32) {
    %c0_i32 = arith.constant 0 : i32
    %c0_i32_0 = arith.constant 0 : i32
    %c0_i32_1 = arith.constant 0 : i32
    return %arg1, %c0_i32, %c0_i32_0 : i32, i32, i32
  }
  func.func @transform_15(%arg0: i32, %arg1: i32) -> (i32, i32, i32) {
    %c0_i32 = arith.constant 0 : i32
    %c0_i32_0 = arith.constant 0 : i32
    %c0_i32_1 = arith.constant 0 : i32
    return %arg1, %c0_i32, %c0_i32_0 : i32, i32, i32
  }
  func.func @transform_16(%arg0: i32, %arg1: i32) -> (i32, i32) {
    %c0_i32 = arith.constant 0 : i32
    %c0_i32_0 = arith.constant 0 : i32
    %c0_i32_1 = arith.constant 0 : i32
    return %c0_i32, %c0_i32_0 : i32, i32
  }
  func.func @transform_17(%arg0: i32, %arg1: i32) -> (i32, i32) {
    %c0_i32 = arith.constant 0 : i32
    %c0_i32_0 = arith.constant 0 : i32
    %c0_i32_1 = arith.constant 0 : i32
    return %c0_i32, %c0_i32_0 : i32, i32
  }
  func.func @transform_18(%arg0: i32, %arg1: i32) -> (i32, i32, i32) {
    %c0_i32 = arith.constant 0 : i32
    %c0_i32_0 = arith.constant 0 : i32
    %c0_i32_1 = arith.constant 0 : i32
    return %arg0, %c0_i32, %c0_i32_0 : i32, i32, i32
  }
}

</mosaic_0001>

<llo_original>
// kernel: predict_sentiment.1
$region0: #{predict_sentiment.1}
  #allocation0 [shape = 'u32[]', space=smem, size = 0x4, offset = 0x4, fixed_abs, tag = 'smem constant byte address 0x4 - core index']
  #allocation1 [shape = 'u32[72,128]{1,0:T(1,128)}', space=vmem, size = 0x9000, scoped, tag = 'internal scratch']
  #allocation2 [shape = 'f32[8,32]{1,0:T(8,128)}', space=vmem, size = 0x1000, scoped, tag = 'scratch operand']
  #allocation3 [shape = 'f32[8,32]{1,0:T(8,128)}', space=vmem, size = 0x1000, scoped, tag = 'scratch operand']
  %s0 = inlined_call_operand.vmem [shape: f32[2,8,32], index: 0, kind: input, shape index: {}]
  %s1 = inlined_call_operand.vmem [shape: f32[2,1,8], index: 1, kind: input, shape index: {}]
  %s2 = inlined_call_operand.vmem [shape: f32[1,32], index: 2, kind: input, shape index: {}]
  %s3 = inlined_call_operand.vmem [shape: f32[1,32], index: 3, kind: input, shape index: {}]
  %s4 = inlined_call_operand.vmem [shape: bf16[2,32,96], index: 4, kind: input, shape index: {}]
  %s5 = inlined_call_operand.vmem [shape: f32[2,1,96], index: 5, kind: input, shape index: {}]
  %s6 = inlined_call_operand.vmem [shape: bf16[2,32,32], index: 6, kind: input, shape index: {}]
  %s7 = inlined_call_operand.vmem [shape: f32[2,1,32], index: 7, kind: input, shape index: {}]
  %s8 = inlined_call_operand.vmem [shape: f32[2,1,32], index: 8, kind: input, shape index: {}]
  %s9 = inlined_call_operand.vmem [shape: f32[2,1,32], index: 9, kind: input, shape index: {}]
  %s10 = inlined_call_operand.vmem [shape: bf16[2,32,64], index: 10, kind: input, shape index: {}]
  %s11 = inlined_call_operand.vmem [shape: f32[2,1,64], index: 11, kind: input, shape index: {}]
  %s12 = inlined_call_operand.vmem [shape: bf16[2,64,32], index: 12, kind: input, shape index: {}]
  %s13 = inlined_call_operand.vmem [shape: f32[2,1,32], index: 13, kind: input, shape index: {}]
  %s14 = inlined_call_operand.vmem [shape: f32[2,1,32], index: 14, kind: input, shape index: {}]
  %s15 = inlined_call_operand.vmem [shape: f32[2,1,32], index: 15, kind: input, shape index: {}]
  %s16 = inlined_call_operand.vmem [shape: bf16[32,32], index: 16, kind: input, shape index: {}]
  %s17 = inlined_call_operand.vmem [shape: f32[1,32], index: 17, kind: input, shape index: {}]
  %s18 = inlined_call_operand.vmem [shape: f32[2,1,32], index: 18, kind: output, shape index: {}]
  %s19 = sld [smem:[#allocation0]]
  $region113: #{predict_sentiment.1} parent=0
    _
  %s21 = ssub.s32 1, %s19
  %s22 = scalar_select 0, %s21, %s19
  loop: start=0, step=1, limit=6
  $region2: #{predict_sentiment.1} parent=0 // loop_pre_header
    _
  $region3: #{predict_sentiment.1} parent=0 // loop_header
    %s24 = sphi 0, %s28
    %p25 = scmp.ge.s32.totalorder %s24, 6
    %s31 = sphi 0, %s43
    %s32 = sphi 0, %s39
    %s33 = sphi 0, %s31
    %s34 = sphi 0, %s32
    %s35 = sphi 0, %s33
    %s36 = sphi 0, %s34
    %s46 = sphi 0, %s48
    %s49 = sphi 0, %s46
    %s50 = sphi 0, %s49
    %s66 = sphi 0, %s50
    %s72 = sphi 0, %s74
    %s75 = sphi 0, %s72
    %s76 = sphi 0, %s75
    %s92 = sphi 0, %s76
    %s96 = sphi 0, %s96
    %s98 = sphi 0, %s96
    %s99 = sphi 0, %s98
    %s113 = sphi 0, %s99
    %s117 = sphi 0, %s117
    %s119 = sphi 0, %s117
    %s120 = sphi 0, %s119
    %s134 = sphi 0, %s120
    %s140 = sphi 0, %s142
    %s143 = sphi 0, %s140
    %s144 = sphi 0, %s143
    %s160 = sphi 0, %s144
    %s166 = sphi 0, %s168
    %s169 = sphi 0, %s166
    %s170 = sphi 0, %s169
    %s186 = sphi 0, %s170
    %s192 = sphi 0, %s194
    %s195 = sphi 0, %s192
    %s196 = sphi 0, %s195
    %s212 = sphi 0, %s196
    %s218 = sphi 0, %s220
    %s221 = sphi 0, %s218
    %s222 = sphi 0, %s221
    %s238 = sphi 0, %s222
    %s244 = sphi 0, %s246
    %s247 = sphi 0, %s244
    %s248 = sphi 0, %s247
    %s264 = sphi 0, %s248
    %s270 = sphi 0, %s272
    %s273 = sphi 0, %s270
    %s274 = sphi 0, %s273
    %s290 = sphi 0, %s274
    %s296 = sphi 0, %s298
    %s299 = sphi 0, %s296
    %s300 = sphi 0, %s299
    %s316 = sphi 0, %s300
    %s322 = sphi 0, %s324
    %s325 = sphi 0, %s322
    %s326 = sphi 0, %s325
    %s342 = sphi 0, %s326
    %s348 = sphi 0, %s350
    %s351 = sphi 0, %s348
    %s352 = sphi 0, %s351
    %s368 = sphi 0, %s352
    %s374 = sphi 0, %s376
    %s377 = sphi 0, %s374
    %s378 = sphi 0, %s377
    %s394 = sphi 0, %s378
    %s400 = sphi 0, %s402
    %s403 = sphi 0, %s400
    %s404 = sphi 0, %s403
    %s420 = sphi 0, %s404
    %s426 = sphi 0, %s428
    %s429 = sphi 0, %s426
    %s430 = sphi 0, %s429
    %s446 = sphi 0, %s430
    %s450 = sphi 0, %s450
    %s452 = sphi 0, %s450
    %s453 = sphi 0, %s452
    %s467 = sphi 0, %s453
    %s471 = sphi 0, %s471
    %s473 = sphi 0, %s471
    %s474 = sphi 0, %s473
    %s488 = sphi 0, %s474
    %s494 = sphi 0, %s496
    %s497 = sphi 0, %s494
    %s498 = sphi 0, %s497
    %s514 = sphi 0, %s498
  $region4: #{predict_sentiment.1} parent=0 // loop_header_branch
    %27 = sbr.rel (%p25) target = $region8
  $region5: #{predict_sentiment.1} parent=0 // loop_body
    %s29 = ssub.s32 %s24, 1
    %s30 = ssub.s32 %s24, 2
    %s37 = sadd.s32 1, %s32
    %p38 = scmp.ge.s32.totalorder %s37, 2
    %s39 = scalar_select %p38, 0, %s37
    %s40 = sadd.s32 1, %s31
    %s41 = scalar_select %p38, %s40, %s31
    %p42 = scmp.ge.s32.totalorder %s41, 2
    %s43 = scalar_select %p42, 0, %s41
    %s44 = ssub.s32 %s31, %s43
    %p45 = scmp.eq.s32.totalorder %s44, 0
    %s47 = sadd.s32 %s46, 1
    %s48 = scalar_select %p45, %s46, %s47
    %p51 = pneg %p45
    %p52 = scmp.eq.s32.totalorder %s24, 3
    %p53 = por %p51, %p52
    %p54 = scmp.ne.s32.totalorder %s46, %s49
    %p55 = scmp.eq.s32.totalorder %s24, 0
    %p56 = por %p54, %p55
    %p57 = scmp.ne.s32.totalorder %s46, %s49
    %p58 = scmp.eq.s32.totalorder %s29, 3
    %p59 = por %p57, %p58
    %p60 = scmp.ne.s32.totalorder %s49, %s50
    %p61 = scmp.eq.s32.totalorder %s29, 0
    %p62 = por %p60, %p61
    %p63 = scmp.ne.s32.totalorder %s49, %s50
    %p64 = scmp.eq.s32.totalorder %s30, 3
    %p65 = por %p63, %p64
    %p67 = scmp.ne.s32.totalorder %s50, %s66
    %p68 = scmp.eq.s32.totalorder %s30, 0
    %p69 = por %p67, %p68
    %s70 = ssub.s32 %s31, %s43
    %p71 = scmp.eq.s32.totalorder %s70, 0
    %s73 = sadd.s32 %s72, 1
    %s74 = scalar_select %p71, %s72, %s73
    %p77 = pneg %p71
    %p78 = scmp.eq.s32.totalorder %s24, 3
    %p79 = por %p77, %p78
    %p80 = scmp.ne.s32.totalorder %s72, %s75
    %p81 = scmp.eq.s32.totalorder %s24, 0
    %p82 = por %p80, %p81
    %p83 = scmp.ne.s32.totalorder %s72, %s75
    %p84 = scmp.eq.s32.totalorder %s29, 3
    %p85 = por %p83, %p84
    %p86 = scmp.ne.s32.totalorder %s75, %s76
    %p87 = scmp.eq.s32.totalorder %s29, 0
    %p88 = por %p86, %p87
    %p89 = scmp.ne.s32.totalorder %s75, %s76
    %p90 = scmp.eq.s32.totalorder %s30, 3
    %p91 = por %p89, %p90
    %p93 = scmp.ne.s32.totalorder %s76, %s92
    %p94 = scmp.eq.s32.totalorder %s30, 0
    %p95 = por %p93, %p94
    %s97 = sadd.s32 %s96, 1
    %p100 = scmp.eq.s32.totalorder %s24, 3
    %p101 = scmp.ne.s32.totalorder %s96, %s98
    %p102 = scmp.eq.s32.totalorder %s24, 0
    %p103 = por %p101, %p102
    %p104 = scmp.ne.s32.totalorder %s96, %s98
    %p105 = scmp.eq.s32.totalorder %s29, 3
    %p106 = por %p104, %p105
    %p107 = scmp.ne.s32.totalorder %s98, %s99
    %p108 = scmp.eq.s32.totalorder %s29, 0
    %p109 = por %p107, %p108
    %p110 = scmp.ne.s32.totalorder %s98, %s99
    %p111 = scmp.eq.s32.totalorder %s30, 3
    %p112 = por %p110, %p111
    %p114 = scmp.ne.s32.totalorder %s99, %s113
    %p115 = scmp.eq.s32.totalorder %s30, 0
    %p116 = por %p114, %p115
    %s118 = sadd.s32 %s117, 1
    %p121 = scmp.eq.s32.totalorder %s24, 3
    %p122 = scmp.ne.s32.totalorder %s117, %s119
    %p123 = scmp.eq.s32.totalorder %s24, 0
    %p124 = por %p122, %p123
    %p125 = scmp.ne.s32.totalorder %s117, %s119
    %p126 = scmp.eq.s32.totalorder %s29, 3
    %p127 = por %p125, %p126
    %p128 = scmp.ne.s32.totalorder %s119, %s120
    %p129 = scmp.eq.s32.totalorder %s29, 0
    %p130 = por %p128, %p129
    %p131 = scmp.ne.s32.totalorder %s119, %s120
    %p132 = scmp.eq.s32.totalorder %s30, 3
    %p133 = por %p131, %p132
    %p135 = scmp.ne.s32.totalorder %s120, %s134
    %p136 = scmp.eq.s32.totalorder %s30, 0
    %p137 = por %p135, %p136
    %s138 = ssub.s32 %s32, %s39
    %p139 = scmp.eq.s32.totalorder %s138, 0
    %s141 = sadd.s32 %s140, 1
    %s142 = scalar_select %p139, %s140, %s141
    %p145 = pneg %p139
    %p146 = scmp.eq.s32.totalorder %s24, 3
    %p147 = por %p145, %p146
    %p148 = scmp.ne.s32.totalorder %s140, %s143
    %p149 = scmp.eq.s32.totalorder %s24, 0
    %p150 = por %p148, %p149
    %p151 = scmp.ne.s32.totalorder %s140, %s143
    %p152 = scmp.eq.s32.totalorder %s29, 3
    %p153 = por %p151, %p152
    %p154 = scmp.ne.s32.totalorder %s143, %s144
    %p155 = scmp.eq.s32.totalorder %s29, 0
    %p156 = por %p154, %p155
    %p157 = scmp.ne.s32.totalorder %s143, %s144
    %p158 = scmp.eq.s32.totalorder %s30, 3
    %p159 = por %p157, %p158
    %p161 = scmp.ne.s32.totalorder %s144, %s160
    %p162 = scmp.eq.s32.totalorder %s30, 0
    %p163 = por %p161, %p162
    %s164 = ssub.s32 %s32, %s39
    %p165 = scmp.eq.s32.totalorder %s164, 0
    %s167 = sadd.s32 %s166, 1
    %s168 = scalar_select %p165, %s166, %s167
    %p171 = pneg %p165
    %p172 = scmp.eq.s32.totalorder %s24, 3
    %p173 = por %p171, %p172
    %p174 = scmp.ne.s32.totalorder %s166, %s169
    %p175 = scmp.eq.s32.totalorder %s24, 0
    %p176 = por %p174, %p175
    %p177 = scmp.ne.s32.totalorder %s166, %s169
    %p178 = scmp.eq.s32.totalorder %s29, 3
    %p179 = por %p177, %p178
    %p180 = scmp.ne.s32.totalorder %s169, %s170
    %p181 = scmp.eq.s32.totalorder %s29, 0
    %p182 = por %p180, %p181
    %p183 = scmp.ne.s32.totalorder %s169, %s170
    %p184 = scmp.eq.s32.totalorder %s30, 3
    %p185 = por %p183, %p184
    %p187 = scmp.ne.s32.totalorder %s170, %s186
    %p188 = scmp.eq.s32.totalorder %s30, 0
    %p189 = por %p187, %p188
    %s190 = ssub.s32 %s32, %s39
    %p191 = scmp.eq.s32.totalorder %s190, 0
    %s193 = sadd.s32 %s192, 1
    %s194 = scalar_select %p191, %s192, %s193
    %p197 = pneg %p191
    %p198 = scmp.eq.s32.totalorder %s24, 3
    %p199 = por %p197, %p198
    %p200 = scmp.ne.s32.totalorder %s192, %s195
    %p201 = scmp.eq.s32.totalorder %s24, 0
    %p202 = por %p200, %p201
    %p203 = scmp.ne.s32.totalorder %s192, %s195
    %p204 = scmp.eq.s32.totalorder %s29, 3
    %p205 = por %p203, %p204
    %p206 = scmp.ne.s32.totalorder %s195, %s196
    %p207 = scmp.eq.s32.totalorder %s29, 0
    %p208 = por %p206, %p207
    %p209 = scmp.ne.s32.totalorder %s195, %s196
    %p210 = scmp.eq.s32.totalorder %s30, 3
    %p211 = por %p209, %p210
    %p213 = scmp.ne.s32.totalorder %s196, %s212
    %p214 = scmp.eq.s32.totalorder %s30, 0
    %p215 = por %p213, %p214
    %s216 = ssub.s32 %s32, %s39
    %p217 = scmp.eq.s32.totalorder %s216, 0
    %s219 = sadd.s32 %s218, 1
    %s220 = scalar_select %p217, %s218, %s219
    %p223 = pneg %p217
    %p224 = scmp.eq.s32.totalorder %s24, 3
    %p225 = por %p223, %p224
    %p226 = scmp.ne.s32.totalorder %s218, %s221
    %p227 = scmp.eq.s32.totalorder %s24, 0
    %p228 = por %p226, %p227
    %p229 = scmp.ne.s32.totalorder %s218, %s221
    %p230 = scmp.eq.s32.totalorder %s29, 3
    %p231 = por %p229, %p230
    %p232 = scmp.ne.s32.totalorder %s221, %s222
    %p233 = scmp.eq.s32.totalorder %s29, 0
    %p234 = por %p232, %p233
    %p235 = scmp.ne.s32.totalorder %s221, %s222
    %p236 = scmp.eq.s32.totalorder %s30, 3
    %p237 = por %p235, %p236
    %p239 = scmp.ne.s32.totalorder %s222, %s238
    %p240 = scmp.eq.s32.totalorder %s30, 0
    %p241 = por %p239, %p240
    %s242 = ssub.s32 %s32, %s39
    %p243 = scmp.eq.s32.totalorder %s242, 0
    %s245 = sadd.s32 %s244, 1
    %s246 = scalar_select %p243, %s244, %s245
    %p249 = pneg %p243
    %p250 = scmp.eq.s32.totalorder %s24, 3
    %p251 = por %p249, %p250
    %p252 = scmp.ne.s32.totalorder %s244, %s247
    %p253 = scmp.eq.s32.totalorder %s24, 0
    %p254 = por %p252, %p253
    %p255 = scmp.ne.s32.totalorder %s244, %s247
    %p256 = scmp.eq.s32.totalorder %s29, 3
    %p257 = por %p255, %p256
    %p258 = scmp.ne.s32.totalorder %s247, %s248
    %p259 = scmp.eq.s32.totalorder %s29, 0
    %p260 = por %p258, %p259
    %p261 = scmp.ne.s32.totalorder %s247, %s248
    %p262 = scmp.eq.s32.totalorder %s30, 3
    %p263 = por %p261, %p262
    %p265 = scmp.ne.s32.totalorder %s248, %s264
    %p266 = scmp.eq.s32.totalorder %s30, 0
    %p267 = por %p265, %p266
    %s268 = ssub.s32 %s32, %s39
    %p269 = scmp.eq.s32.totalorder %s268, 0
    %s271 = sadd.s32 %s270, 1
    %s272 = scalar_select %p269, %s270, %s271
    %p275 = pneg %p269
    %p276 = scmp.eq.s32.totalorder %s24, 3
    %p277 = por %p275, %p276
    %p278 = scmp.ne.s32.totalorder %s270, %s273
    %p279 = scmp.eq.s32.totalorder %s24, 0
    %p280 = por %p278, %p279
    %p281 = scmp.ne.s32.totalorder %s270, %s273
    %p282 = scmp.eq.s32.totalorder %s29, 3
    %p283 = por %p281, %p282
    %p284 = scmp.ne.s32.totalorder %s273, %s274
    %p285 = scmp.eq.s32.totalorder %s29, 0
    %p286 = por %p284, %p285
    %p287 = scmp.ne.s32.totalorder %s273, %s274
    %p288 = scmp.eq.s32.totalorder %s30, 3
    %p289 = por %p287, %p288
    %p291 = scmp.ne.s32.totalorder %s274, %s290
    %p292 = scmp.eq.s32.totalorder %s30, 0
    %p293 = por %p291, %p292
    %s294 = ssub.s32 %s32, %s39
    %p295 = scmp.eq.s32.totalorder %s294, 0
    %s297 = sadd.s32 %s296, 1
    %s298 = scalar_select %p295, %s296, %s297
    %p301 = pneg %p295
    %p302 = scmp.eq.s32.totalorder %s24, 3
    %p303 = por %p301, %p302
    %p304 = scmp.ne.s32.totalorder %s296, %s299
    %p305 = scmp.eq.s32.totalorder %s24, 0
    %p306 = por %p304, %p305
    %p307 = scmp.ne.s32.totalorder %s296, %s299
    %p308 = scmp.eq.s32.totalorder %s29, 3
    %p309 = por %p307, %p308
    %p310 = scmp.ne.s32.totalorder %s299, %s300
    %p311 = scmp.eq.s32.totalorder %s29, 0
    %p312 = por %p310, %p311
    %p313 = scmp.ne.s32.totalorder %s299, %s300
    %p314 = scmp.eq.s32.totalorder %s30, 3
    %p315 = por %p313, %p314
    %p317 = scmp.ne.s32.totalorder %s300, %s316
    %p318 = scmp.eq.s32.totalorder %s30, 0
    %p319 = por %p317, %p318
    %s320 = ssub.s32 %s32, %s39
    %p321 = scmp.eq.s32.totalorder %s320, 0
    %s323 = sadd.s32 %s322, 1
    %s324 = scalar_select %p321, %s322, %s323
    %p327 = pneg %p321
    %p328 = scmp.eq.s32.totalorder %s24, 3
    %p329 = por %p327, %p328
    %p330 = scmp.ne.s32.totalorder %s322, %s325
    %p331 = scmp.eq.s32.totalorder %s24, 0
    %p332 = por %p330, %p331
    %p333 = scmp.ne.s32.totalorder %s322, %s325
    %p334 = scmp.eq.s32.totalorder %s29, 3
    %p335 = por %p333, %p334
    %p336 = scmp.ne.s32.totalorder %s325, %s326
    %p337 = scmp.eq.s32.totalorder %s29, 0
    %p338 = por %p336, %p337
    %p339 = scmp.ne.s32.totalorder %s325, %s326
    %p340 = scmp.eq.s32.totalorder %s30, 3
    %p341 = por %p339, %p340
    %p343 = scmp.ne.s32.totalorder %s326, %s342
    %p344 = scmp.eq.s32.totalorder %s30, 0
    %p345 = por %p343, %p344
    %s346 = ssub.s32 %s32, %s39
    %p347 = scmp.eq.s32.totalorder %s346, 0
    %s349 = sadd.s32 %s348, 1
    %s350 = scalar_select %p347, %s348, %s349
    %p353 = pneg %p347
    %p354 = scmp.eq.s32.totalorder %s24, 3
    %p355 = por %p353, %p354
    %p356 = scmp.ne.s32.totalorder %s348, %s351
    %p357 = scmp.eq.s32.totalorder %s24, 0
    %p358 = por %p356, %p357
    %p359 = scmp.ne.s32.totalorder %s348, %s351
    %p360 = scmp.eq.s32.totalorder %s29, 3
    %p361 = por %p359, %p360
    %p362 = scmp.ne.s32.totalorder %s351, %s352
    %p363 = scmp.eq.s32.totalorder %s29, 0
    %p364 = por %p362, %p363
    %p365 = scmp.ne.s32.totalorder %s351, %s352
    %p366 = scmp.eq.s32.totalorder %s30, 3
    %p367 = por %p365, %p366
    %p369 = scmp.ne.s32.totalorder %s352, %s368
    %p370 = scmp.eq.s32.totalorder %s30, 0
    %p371 = por %p369, %p370
    %s372 = ssub.s32 %s32, %s39
    %p373 = scmp.eq.s32.totalorder %s372, 0
    %s375 = sadd.s32 %s374, 1
    %s376 = scalar_select %p373, %s374, %s375
    %p379 = pneg %p373
    %p380 = scmp.eq.s32.totalorder %s24, 3
    %p381 = por %p379, %p380
    %p382 = scmp.ne.s32.totalorder %s374, %s377
    %p383 = scmp.eq.s32.totalorder %s24, 0
    %p384 = por %p382, %p383
    %p385 = scmp.ne.s32.totalorder %s374, %s377
    %p386 = scmp.eq.s32.totalorder %s29, 3
    %p387 = por %p385, %p386
    %p388 = scmp.ne.s32.totalorder %s377, %s378
    %p389 = scmp.eq.s32.totalorder %s29, 0
    %p390 = por %p388, %p389
    %p391 = scmp.ne.s32.totalorder %s377, %s378
    %p392 = scmp.eq.s32.totalorder %s30, 3
    %p393 = por %p391, %p392
    %p395 = scmp.ne.s32.totalorder %s378, %s394
    %p396 = scmp.eq.s32.totalorder %s30, 0
    %p397 = por %p395, %p396
    %s398 = ssub.s32 %s32, %s39
    %p399 = scmp.eq.s32.totalorder %s398, 0
    %s401 = sadd.s32 %s400, 1
    %s402 = scalar_select %p399, %s400, %s401
    %p405 = pneg %p399
    %p406 = scmp.eq.s32.totalorder %s24, 3
    %p407 = por %p405, %p406
    %p408 = scmp.ne.s32.totalorder %s400, %s403
    %p409 = scmp.eq.s32.totalorder %s24, 0
    %p410 = por %p408, %p409
    %p411 = scmp.ne.s32.totalorder %s400, %s403
    %p412 = scmp.eq.s32.totalorder %s29, 3
    %p413 = por %p411, %p412
    %p414 = scmp.ne.s32.totalorder %s403, %s404
    %p415 = scmp.eq.s32.totalorder %s29, 0
    %p416 = por %p414, %p415
    %p417 = scmp.ne.s32.totalorder %s403, %s404
    %p418 = scmp.eq.s32.totalorder %s30, 3
    %p419 = por %p417, %p418
    %p421 = scmp.ne.s32.totalorder %s404, %s420
    %p422 = scmp.eq.s32.totalorder %s30, 0
    %p423 = por %p421, %p422
    %s424 = ssub.s32 %s32, %s39
    %p425 = scmp.eq.s32.totalorder %s424, 0
    %s427 = sadd.s32 %s426, 1
    %s428 = scalar_select %p425, %s426, %s427
    %p431 = pneg %p425
    %p432 = scmp.eq.s32.totalorder %s24, 3
    %p433 = por %p431, %p432
    %p434 = scmp.ne.s32.totalorder %s426, %s429
    %p435 = scmp.eq.s32.totalorder %s24, 0
    %p436 = por %p434, %p435
    %p437 = scmp.ne.s32.totalorder %s426, %s429
    %p438 = scmp.eq.s32.totalorder %s29, 3
    %p439 = por %p437, %p438
    %p440 = scmp.ne.s32.totalorder %s429, %s430
    %p441 = scmp.eq.s32.totalorder %s29, 0
    %p442 = por %p440, %p441
    %p443 = scmp.ne.s32.totalorder %s429, %s430
    %p444 = scmp.eq.s32.totalorder %s30, 3
    %p445 = por %p443, %p444
    %p447 = scmp.ne.s32.totalorder %s430, %s446
    %p448 = scmp.eq.s32.totalorder %s30, 0
    %p449 = por %p447, %p448
    %s451 = sadd.s32 %s450, 1
    %p454 = scmp.eq.s32.totalorder %s24, 3
    %p455 = scmp.ne.s32.totalorder %s450, %s452
    %p456 = scmp.eq.s32.totalorder %s24, 0
    %p457 = por %p455, %p456
    %p458 = scmp.ne.s32.totalorder %s450, %s452
    %p459 = scmp.eq.s32.totalorder %s29, 3
    %p460 = por %p458, %p459
    %p461 = scmp.ne.s32.totalorder %s452, %s453
    %p462 = scmp.eq.s32.totalorder %s29, 0
    %p463 = por %p461, %p462
    %p464 = scmp.ne.s32.totalorder %s452, %s453
    %p465 = scmp.eq.s32.totalorder %s30, 3
    %p466 = por %p464, %p465
    %p468 = scmp.ne.s32.totalorder %s453, %s467
    %p469 = scmp.eq.s32.totalorder %s30, 0
    %p470 = por %p468, %p469
    %s472 = sadd.s32 %s471, 1
    %p475 = scmp.eq.s32.totalorder %s24, 3
    %p476 = scmp.ne.s32.totalorder %s471, %s473
    %p477 = scmp.eq.s32.totalorder %s24, 0
    %p478 = por %p476, %p477
    %p479 = scmp.ne.s32.totalorder %s471, %s473
    %p480 = scmp.eq.s32.totalorder %s29, 3
    %p481 = por %p479, %p480
    %p482 = scmp.ne.s32.totalorder %s473, %s474
    %p483 = scmp.eq.s32.totalorder %s29, 0
    %p484 = por %p482, %p483
    %p485 = scmp.ne.s32.totalorder %s473, %s474
    %p486 = scmp.eq.s32.totalorder %s30, 3
    %p487 = por %p485, %p486
    %p489 = scmp.ne.s32.totalorder %s474, %s488
    %p490 = scmp.eq.s32.totalorder %s30, 0
    %p491 = por %p489, %p490
    %s492 = ssub.s32 %s31, %s43
    %p493 = scmp.eq.s32.totalorder %s492, 0
    %s495 = sadd.s32 %s494, 1
    %s496 = scalar_select %p493, %s494, %s495
    %p499 = pneg %p493
    %p500 = scmp.eq.s32.totalorder %s24, 3
    %p501 = por %p499, %p500
    %p502 = scmp.ne.s32.totalorder %s494, %s497
    %p503 = scmp.eq.s32.totalorder %s24, 0
    %p504 = por %p502, %p503
    %p505 = scmp.ne.s32.totalorder %s494, %s497
    %p506 = scmp.eq.s32.totalorder %s29, 3
    %p507 = por %p505, %p506
    %p508 = scmp.ne.s32.totalorder %s497, %s498
    %p509 = scmp.eq.s32.totalorder %s29, 0
    %p510 = por %p508, %p509
    %p511 = scmp.ne.s32.totalorder %s497, %s498
    %p512 = scmp.eq.s32.totalorder %s30, 3
    %p513 = por %p511, %p512
    %p515 = scmp.ne.s32.totalorder %s498, %s514
    %p516 = scmp.eq.s32.totalorder %s30, 0
    %p517 = por %p515, %p516
    %p518 = scmp.le.s32.totalorder 1, %s24
    %p519 = scmp.lt.s32.totalorder %s24, 5
    %p520 = pnand %p518, %p519
    %p521 = pneg %p520
    // Predicated region
    $region9: #{predict_sentiment.1} parent=5 // pred_check
      _
    $region10: #{predict_sentiment.1} parent=5 // pred_check_branch
      %523 = sbr.rel (%p520) target = $region12
    $region11: #{predict_sentiment.1} parent=5 // pred_region
      %s524 = ssub.s32 %s24, 1
      // Predicated region
      $region13: #{predict_sentiment.1} parent=11 // pred_check
        %p525 = pneg %p109
      $region14: #{predict_sentiment.1} parent=11 // pred_check_branch
        %527 = sbr.rel (%p525) target = $region16
      $region15: #{predict_sentiment.1} parent=11 // pred_region
        _
      $region16: #{predict_sentiment.1} parent=11 // pred_fallthru
        _
      // Predicated region
      $region17: #{predict_sentiment.1} parent=11 // pred_check
        %p528 = pneg %p130
      $region18: #{predict_sentiment.1} parent=11 // pred_check_branch
        %530 = sbr.rel (%p528) target = $region20
      $region19: #{predict_sentiment.1} parent=11 // pred_region
        _
      $region20: #{predict_sentiment.1} parent=11 // pred_fallthru
        _
      // Predicated region
      $region21: #{predict_sentiment.1} parent=11 // pred_check
        %p531 = pneg %p463
      $region22: #{predict_sentiment.1} parent=11 // pred_check_branch
        %533 = sbr.rel (%p531) target = $region24
      $region23: #{predict_sentiment.1} parent=11 // pred_region
        _
      $region24: #{predict_sentiment.1} parent=11 // pred_fallthru
        _
      // Predicated region
      $region25: #{predict_sentiment.1} parent=11 // pred_check
        %p534 = pneg %p484
      $region26: #{predict_sentiment.1} parent=11 // pred_check_branch
        %536 = sbr.rel (%p534) target = $region28
      $region27: #{predict_sentiment.1} parent=11 // pred_region
        _
      $region28: #{predict_sentiment.1} parent=11 // pred_fallthru
        _
    $region12: #{predict_sentiment.1} parent=5 // pred_fallthru
      _
    %p537 = scmp.lt.s32.totalorder %s24, 4
    // Predicated region
    $region29: #{predict_sentiment.1} parent=5 // pred_check
      %p538 = pneg %p537
    $region30: #{predict_sentiment.1} parent=5 // pred_check_branch
      %540 = sbr.rel (%p538) target = $region32
    $region31: #{predict_sentiment.1} parent=5 // pred_region
      // Predicated region
      $region33: #{predict_sentiment.1} parent=31 // pred_check
        %p541 = pneg %p56
      $region34: #{predict_sentiment.1} parent=31 // pred_check_branch
        %543 = sbr.rel (%p541) target = $region36
      $region35: #{predict_sentiment.1} parent=31 // pred_region
        %p544 = scmp.lt.s32.totalorder %s31, 1
        %s545 = scalar_select %p544, %s31, 1
        %s546 = smul.addr %s545, 8
        %s547 = scalar_lea.vmem %s0, %s546
      $region36: #{predict_sentiment.1} parent=31 // pred_fallthru
        _
      // Predicated region
      $region37: #{predict_sentiment.1} parent=31 // pred_check
        %p548 = pneg %p82
      $region38: #{predict_sentiment.1} parent=31 // pred_check_branch
        %550 = sbr.rel (%p548) target = $region40
      $region39: #{predict_sentiment.1} parent=31 // pred_region
        %p551 = scmp.lt.s32.totalorder %s31, 1
        %s552 = scalar_select %p551, %s31, 1
        %s553 = scalar_lea.vmem %s1, %s552
      $region40: #{predict_sentiment.1} parent=31 // pred_fallthru
        _
      // Predicated region
      $region41: #{predict_sentiment.1} parent=31 // pred_check
        %p554 = pneg %p150
      $region42: #{predict_sentiment.1} parent=31 // pred_check_branch
        %556 = sbr.rel (%p554) target = $region44
      $region43: #{predict_sentiment.1} parent=31 // pred_region
        %p557 = scmp.lt.s32.totalorder %s32, 1
        %s558 = scalar_select %p557, %s32, 1
        %s559 = smul.addr %s558, 4
        %s560 = smul.addr %s559, 4
        %s561 = scalar_lea.vmem %s4, %s560
      $region44: #{predict_sentiment.1} parent=31 // pred_fallthru
        _
      // Predicated region
      $region45: #{predict_sentiment.1} parent=31 // pred_check
        %p562 = pneg %p176
      $region46: #{predict_sentiment.1} parent=31 // pred_check_branch
        %564 = sbr.rel (%p562) target = $region48
      $region47: #{predict_sentiment.1} parent=31 // pred_region
        %p565 = scmp.lt.s32.totalorder %s32, 1
        %s566 = scalar_select %p565, %s32, 1
        %s567 = scalar_lea.vmem %s5, %s566
      $region48: #{predict_sentiment.1} parent=31 // pred_fallthru
        _
      // Predicated region
      $region49: #{predict_sentiment.1} parent=31 // pred_check
        %p568 = pneg %p202
      $region50: #{predict_sentiment.1} parent=31 // pred_check_branch
        %570 = sbr.rel (%p568) target = $region52
      $region51: #{predict_sentiment.1} parent=31 // pred_region
        %p571 = scmp.lt.s32.totalorder %s32, 1
        %s572 = scalar_select %p571, %s32, 1
        %s573 = smul.addr %s572, 4
        %s574 = smul.addr %s573, 4
        %s575 = scalar_lea.vmem %s6, %s574
      $region52: #{predict_sentiment.1} parent=31 // pred_fallthru
        _
      // Predicated region
      $region53: #{predict_sentiment.1} parent=31 // pred_check
        %p576 = pneg %p228
      $region54: #{predict_sentiment.1} parent=31 // pred_check_branch
        %578 = sbr.rel (%p576) target = $region56
      $region55: #{predict_sentiment.1} parent=31 // pred_region
        %p579 = scmp.lt.s32.totalorder %s32, 1
        %s580 = scalar_select %p579, %s32, 1
        %s581 = scalar_lea.vmem %s7, %s580
      $region56: #{predict_sentiment.1} parent=31 // pred_fallthru
        _
      // Predicated region
      $region57: #{predict_sentiment.1} parent=31 // pred_check
        %p582 = pneg %p254
      $region58: #{predict_sentiment.1} parent=31 // pred_check_branch
        %584 = sbr.rel (%p582) target = $region60
      $region59: #{predict_sentiment.1} parent=31 // pred_region
        %p585 = scmp.lt.s32.totalorder %s32, 1
        %s586 = scalar_select %p585, %s32, 1
        %s587 = scalar_lea.vmem %s8, %s586
      $region60: #{predict_sentiment.1} parent=31 // pred_fallthru
        _
      // Predicated region
      $region61: #{predict_sentiment.1} parent=31 // pred_check
        %p588 = pneg %p280
      $region62: #{predict_sentiment.1} parent=31 // pred_check_branch
        %590 = sbr.rel (%p588) target = $region64
      $region63: #{predict_sentiment.1} parent=31 // pred_region
        %p591 = scmp.lt.s32.totalorder %s32, 1
        %s592 = scalar_select %p591, %s32, 1
        %s593 = scalar_lea.vmem %s9, %s592
      $region64: #{predict_sentiment.1} parent=31 // pred_fallthru
        _
      // Predicated region
      $region65: #{predict_sentiment.1} parent=31 // pred_check
        %p594 = pneg %p306
      $region66: #{predict_sentiment.1} parent=31 // pred_check_branch
        %596 = sbr.rel (%p594) target = $region68
      $region67: #{predict_sentiment.1} parent=31 // pred_region
        %p597 = scmp.lt.s32.totalorder %s32, 1
        %s598 = scalar_select %p597, %s32, 1
        %s599 = smul.addr %s598, 4
        %s600 = smul.addr %s599, 4
        %s601 = scalar_lea.vmem %s10, %s600
      $region68: #{predict_sentiment.1} parent=31 // pred_fallthru
        _
      // Predicated region
      $region69: #{predict_sentiment.1} parent=31 // pred_check
        %p602 = pneg %p332
      $region70: #{predict_sentiment.1} parent=31 // pred_check_branch
        %604 = sbr.rel (%p602) target = $region72
      $region71: #{predict_sentiment.1} parent=31 // pred_region
        %p605 = scmp.lt.s32.totalorder %s32, 1
        %s606 = scalar_select %p605, %s32, 1
        %s607 = scalar_lea.vmem %s11, %s606
      $region72: #{predict_sentiment.1} parent=31 // pred_fallthru
        _
      // Predicated region
      $region73: #{predict_sentiment.1} parent=31 // pred_check
        %p608 = pneg %p358
      $region74: #{predict_sentiment.1} parent=31 // pred_check_branch
        %610 = sbr.rel (%p608) target = $region76
      $region75: #{predict_sentiment.1} parent=31 // pred_region
        %p611 = scmp.lt.s32.totalorder %s32, 1
        %s612 = scalar_select %p611, %s32, 1
        %s613 = smul.addr %s612, 8
        %s614 = smul.addr %s613, 4
        %s615 = scalar_lea.vmem %s12, %s614
      $region76: #{predict_sentiment.1} parent=31 // pred_fallthru
        _
      // Predicated region
      $region77: #{predict_sentiment.1} parent=31 // pred_check
        %p616 = pneg %p384
      $region78: #{predict_sentiment.1} parent=31 // pred_check_branch
        %618 = sbr.rel (%p616) target = $region80
      $region79: #{predict_sentiment.1} parent=31 // pred_region
        %p619 = scmp.lt.s32.totalorder %s32, 1
        %s620 = scalar_select %p619, %s32, 1
        %s621 = scalar_lea.vmem %s13, %s620
      $region80: #{predict_sentiment.1} parent=31 // pred_fallthru
        _
      // Predicated region
      $region81: #{predict_sentiment.1} parent=31 // pred_check
        %p622 = pneg %p410
      $region82: #{predict_sentiment.1} parent=31 // pred_check_branch
        %624 = sbr.rel (%p622) target = $region84
      $region83: #{predict_sentiment.1} parent=31 // pred_region
        %p625 = scmp.lt.s32.totalorder %s32, 1
        %s626 = scalar_select %p625, %s32, 1
        %s627 = scalar_lea.vmem %s14, %s626
      $region84: #{predict_sentiment.1} parent=31 // pred_fallthru
        _
      // Predicated region
      $region85: #{predict_sentiment.1} parent=31 // pred_check
        %p628 = pneg %p436
      $region86: #{predict_sentiment.1} parent=31 // pred_check_branch
        %630 = sbr.rel (%p628) target = $region88
      $region87: #{predict_sentiment.1} parent=31 // pred_region
        %p631 = scmp.lt.s32.totalorder %s32, 1
        %s632 = scalar_select %p631, %s32, 1
        %s633 = scalar_lea.vmem %s15, %s632
      $region88: #{predict_sentiment.1} parent=31 // pred_fallthru
        _
    $region32: #{predict_sentiment.1} parent=5 // pred_fallthru
      _
    %p634 = scmp.le.s32.totalorder 1, %s24
    %p635 = scmp.lt.s32.totalorder %s24, 5
    %p636 = pnand %p634, %p635
    %p637 = pneg %p636
    // Predicated region
    $region89: #{predict_sentiment.1} parent=5 // pred_check
      _
    $region90: #{predict_sentiment.1} parent=5 // pred_check_branch
      %639 = sbr.rel (%p636) target = $region92
    $region91: #{predict_sentiment.1} parent=5 // pred_region
      %s640 = ssub.s32 %s24, 1
      %p641 = scmp.lt.s32.totalorder %s33, 1
      %s642 = scalar_select %p641, %s33, 1
      %s643 = smul.addr %s642, 8
      %s644 = scalar_lea.vmem %s0, %s643
      %p645 = pneg %p62
      %p646 = pneg %p59
      %p647 = scmp.lt.s32.totalorder %s33, 1
      %s648 = scalar_select %p647, %s33, 1
      %s649 = scalar_lea.vmem %s1, %s648
      %p650 = pneg %p88
      %p651 = pneg %p85
      %p652 = pneg %p109
      %p653 = pneg %p106
      %p654 = pneg %p130
      %p655 = pneg %p127
      %p656 = scmp.lt.s32.totalorder %s34, 1
      %s657 = scalar_select %p656, %s34, 1
      %s658 = smul.addr %s657, 4
      %s659 = smul.addr %s658, 4
      %s660 = scalar_lea.vmem %s4, %s659
      %p661 = pneg %p156
      %p662 = pneg %p153
      %p663 = scmp.lt.s32.totalorder %s34, 1
      %s664 = scalar_select %p663, %s34, 1
      %s665 = scalar_lea.vmem %s5, %s664
      %p666 = pneg %p182
      %p667 = pneg %p179
      %p668 = scmp.lt.s32.totalorder %s34, 1
      %s669 = scalar_select %p668, %s34, 1
      %s670 = smul.addr %s669, 4
      %s671 = smul.addr %s670, 4
      %s672 = scalar_lea.vmem %s6, %s671
      %p673 = pneg %p208
      %p674 = pneg %p205
      %p675 = scmp.lt.s32.totalorder %s34, 1
      %s676 = scalar_select %p675, %s34, 1
      %s677 = scalar_lea.vmem %s7, %s676
      %p678 = pneg %p234
      %p679 = pneg %p231
      %p680 = scmp.lt.s32.totalorder %s34, 1
      %s681 = scalar_select %p680, %s34, 1
      %s682 = scalar_lea.vmem %s8, %s681
      %p683 = pneg %p260
      %p684 = pneg %p257
      %p685 = scmp.lt.s32.totalorder %s34, 1
      %s686 = scalar_select %p685, %s34, 1
      %s687 = scalar_lea.vmem %s9, %s686
      %p688 = pneg %p286
      %p689 = pneg %p283
      %p690 = scmp.lt.s32.totalorder %s34, 1
      %s691 = scalar_select %p690, %s34, 1
      %s692 = smul.addr %s691, 4
      %s693 = smul.addr %s692, 4
      %s694 = scalar_lea.vmem %s10, %s693
      %p695 = pneg %p312
      %p696 = pneg %p309
      %p697 = scmp.lt.s32.totalorder %s34, 1
      %s698 = scalar_select %p697, %s34, 1
      %s699 = scalar_lea.vmem %s11, %s698
      %p700 = pneg %p338
      %p701 = pneg %p335
      %p702 = scmp.lt.s32.totalorder %s34, 1
      %s703 = scalar_select %p702, %s34, 1
      %s704 = smul.addr %s703, 8
      %s705 = smul.addr %s704, 4
      %s706 = scalar_lea.vmem %s12, %s705
      %p707 = pneg %p364
      %p708 = pneg %p361
      %p709 = scmp.lt.s32.totalorder %s34, 1
      %s710 = scalar_select %p709, %s34, 1
      %s711 = scalar_lea.vmem %s13, %s710
      %p712 = pneg %p390
      %p713 = pneg %p387
      %p714 = scmp.lt.s32.totalorder %s34, 1
      %s715 = scalar_select %p714, %s34, 1
      %s716 = scalar_lea.vmem %s14, %s715
      %p717 = pneg %p416
      %p718 = pneg %p413
      %p719 = scmp.lt.s32.totalorder %s34, 1
      %s720 = scalar_select %p719, %s34, 1
      %s721 = scalar_lea.vmem %s15, %s720
      %p722 = pneg %p442
      %p723 = pneg %p439
      %p724 = pneg %p463
      %p725 = pneg %p460
      %p726 = pneg %p484
      %p727 = pneg %p481
      %p728 = pneg %p510
      %p729 = pneg %p507
      %p730 = scmp.lt.s32.totalorder %s33, 1
      %s731 = scalar_select %p730, %s33, 1
      %s732 = scalar_lea.vmem %s18, %s731
      %p733 = scmp.lt.s32.totalorder %s33, 1
      %s734 = scalar_select %p733, %s33, 1
      %s735 = smul.addr %s734, 8
      %s736 = scalar_lea.vmem %s0, %s735
      %p737 = scmp.lt.s32.totalorder %s33, 1
      %s738 = scalar_select %p737, %s33, 1
      %s739 = scalar_lea.vmem %s1, %s738
      %p740 = scmp.lt.s32.totalorder %s34, 1
      %s741 = scalar_select %p740, %s34, 1
      %s742 = smul.addr %s741, 4
      %s743 = smul.addr %s742, 4
      %s744 = scalar_lea.vmem %s4, %s743
      %p745 = scmp.lt.s32.totalorder %s34, 1
      %s746 = scalar_select %p745, %s34, 1
      %s747 = scalar_lea.vmem %s5, %s746
      %p748 = scmp.lt.s32.totalorder %s34, 1
      %s749 = scalar_select %p748, %s34, 1
      %s750 = smul.addr %s749, 4
      %s751 = smul.addr %s750, 4
      %s752 = scalar_lea.vmem %s6, %s751
      %p753 = scmp.lt.s32.totalorder %s34, 1
      %s754 = scalar_select %p753, %s34, 1
      %s755 = scalar_lea.vmem %s7, %s754
      %p756 = scmp.lt.s32.totalorder %s34, 1
      %s757 = scalar_select %p756, %s34, 1
      %s758 = scalar_lea.vmem %s8, %s757
      %p759 = scmp.lt.s32.totalorder %s34, 1
      %s760 = scalar_select %p759, %s34, 1
      %s761 = scalar_lea.vmem %s9, %s760
      %p762 = scmp.lt.s32.totalorder %s34, 1
      %s763 = scalar_select %p762, %s34, 1
      %s764 = smul.addr %s763, 4
      %s765 = smul.addr %s764, 4
      %s766 = scalar_lea.vmem %s10, %s765
      %p767 = scmp.lt.s32.totalorder %s34, 1
      %s768 = scalar_select %p767, %s34, 1
      %s769 = scalar_lea.vmem %s11, %s768
      %p770 = scmp.lt.s32.totalorder %s34, 1
      %s771 = scalar_select %p770, %s34, 1
      %s772 = smul.addr %s771, 8
      %s773 = smul.addr %s772, 4
      %s774 = scalar_lea.vmem %s12, %s773
      %p775 = scmp.lt.s32.totalorder %s34, 1
      %s776 = scalar_select %p775, %s34, 1
      %s777 = scalar_lea.vmem %s13, %s776
      %p778 = scmp.lt.s32.totalorder %s34, 1
      %s779 = scalar_select %p778, %s34, 1
      %s780 = scalar_lea.vmem %s14, %s779
      %p781 = scmp.lt.s32.totalorder %s34, 1
      %s782 = scalar_select %p781, %s34, 1
      %s783 = scalar_lea.vmem %s15, %s782
      %p784 = scmp.lt.s32.totalorder %s33, 1
      %s785 = scalar_select %p784, %s33, 1
      %s786 = scalar_lea.vmem %s18, %s785
      %p788 = scmp.eq.s32.totalorder %s34, 0
      // Predicated region
      $region93: #{predict_sentiment.1} parent=91 // pred_check
        %p789 = pneg %p788
      $region94: #{predict_sentiment.1} parent=91 // pred_check_branch
        %791 = sbr.rel (%p789) target = $region96
      $region95: #{predict_sentiment.1} parent=91 // pred_region
        %v792 = vld [vmem:[%s736] sm:$0xff]
        %v793 = vld [vmem:[%s2] sm:$0x1]
        %v794 = vld [vmem:[%s3] sm:$0x1]
        %vm795 = vcmask 261120
        %v796 = vsel %vm795, %v792, 0.0
        %797 = vadd.xlane.f32.xlu0 %v796
        %v798 = vpop.xlane.xlu0 %797
        %v799 = vrcp.pop 32.0
        %v800 = vmul.f32 32.0, %v799
        %v801 = vsub.f32 1.0, %v800
        %v802 = vmul.f32 %v799, %v801
        %v803 = vadd.f32 %v799, %v802
        %vm804 = vweird.f32 %v799
        %v805 = vsel %vm804, %v799, %v803
        %v806 = vmul.f32 %v798, %v805
        %v807 = vsub.f32 %v792, %v806
        %v808 = vmul.f32 %v807, %v807
        %v809 = vsel %vm795, %v808, 0.0
        %810 = vadd.xlane.f32.xlu0 %v809
        %v811 = vpop.xlane.xlu0 %810
        %v812 = vmul.f32 %v811, %v805
        %v813 = vadd.f32 %v812, 1e-12
        %v814 = vrsqrt.pop %v813
        %v815 = vmul.f32 %v814, %v813
        %v816 = vmul.f32 %v815, %v814
        %v817 = vmul.f32 0.5, %v816
        %v818 = vsub.f32 1.5, %v817
        %v819 = vmul.f32 %v814, %v818
        %vm820 = vweird.f32 %v813
        %vm821 = vweird.f32 %v814
        %vm822 = vmor %vm820, %vm821
        %v823 = vsel %vm822, %v814, %v819
        %v824 = vmul.f32 %v807, %v823
        %v826 = vperm.slane %v793, 0
        %v828 = vmul.f32 %v824, %v826
        %v830 = vperm.slane %v794, 0
        %v832 = vadd.f32 %v828, %v830
        %833 = vst.msk [vmem:[#allocation2] sm:$0xff] %vm795, %v832
      $region96: #{predict_sentiment.1} parent=91 // pred_fallthru
        _
      %v834 = vld [vmem:[#allocation2] sm:$0xff]
      %v835 = vld [vmem:[%s739] sm:$0x1]
      %v836 = vpack.c.bf16 %v834, %v834
      %v837 = vld [vmem:[%s744] sm:$0xf]
      %v838 = vld [vmem:[%s744 + $0x4] sm:$0xf]
      %v839 = vld [vmem:[%s744 + $0x8] sm:$0xf]
      %v840 = vld [vmem:[%s744 + $0xc] sm:$0xf]
      %v841 = vld [vmem:[%s747] sm:$0x1]
      %v843 = vperm.slane %v841, 0
      %v849 = vunpack.c.l.b16 %v837
      %v850 = vunpack.c.l.b16 %v838
      %v851 = vunpack.c.l.b16 %v839
      %v852 = vunpack.c.l.b16 %v840
      %v853 = vpack.c.b16 %v850, %v849
      %v854 = vpack.c.b16 %v852, %v851
      %vm857 = vcmask 261120
      %v859 = vsel %vm857, %v836, 0
      %861 = vmatpush.bf16.msra.mxu0 0
      %862 = vmatpush.bf16.msra.mxu0 0
      %863 = vmatpush.bf16.msra.mxu0 0
      %864 = vmatpush.bf16.msra.mxu0 0
      %865 = vmatpush.bf16.msra.mxu0 0
      %866 = vmatpush.bf16.msra.mxu0 0
      %867 = vmatpush.bf16.msra.mxu0 %v854
      %868 = vmatpush.bf16.msra.mxu0 %v853
      %869 = vmatmul.bf16.gmra.mxu0 %v859
      %v870 = vpop.f32.mrf.mxu0
      %v871 = vadd.f32 %v843, %v870
      %v872 = vpop.f32.mrf.mxu0
      %873 = vdwg.mxu0
      %v874 = vpack.c.bf16 %v871, %v871
      %876 = vrot.lane.b32.xlu0 %v874, 96
      %v877 = vpop.permute.xlu0 %876
      %vm878 = vcmask 130048
      %v880 = vsel %vm878, %v874, 0
      %v883 = vsel %vm878, %v877, 0
      %885 = vmatpush.bf16.xpose.msra.mxu0 0
      %886 = vmatpush.bf16.xpose.msra.mxu0 0
      %887 = vmatpush.bf16.xpose.msra.mxu0 0
      %888 = vmatpush.bf16.xpose.msra.mxu0 0
      %889 = vmatpush.bf16.xpose.msra.mxu0 0
      %890 = vmatpush.bf16.xpose.msra.mxu0 0
      %891 = vmatpush.bf16.xpose.msra.mxu0 0
      %892 = vmatpush.bf16.xpose.msra.mxu0 %v883
      %893 = vmatmul.bf16.gmra.mxu0 %v880
      %v894 = vpop.f32.mrf.mxu0
      %v895 = vadd.f32 0.0, %v894
      %v896 = vpop.f32.mrf.mxu0
      %897 = vdwg.mxu0
      %v898 = vmul.f32 %v895, 0.25
      %v900 = vperm.slane %v835, 0
      %v902 = vadd.f32 %v898, %v900
      %vm903 = vcmask 64512
      %v904 = vsel %vm903, %v902, -inf
      %905 = vmax.xlane.f32.xlu0 %v904
      %v906 = vpop.xlane.xlu0 %905
      %v907 = vsub.f32 %v902, %v906
      %v908 = vmul.f32 %v907, 1.442695
      %v909 = vpow.pop %v908
      %v910 = vsel %vm903, %v909, 0.0
      %911 = vadd.xlane.f32.xlu0 %v910
      %v912 = vpop.xlane.xlu0 %911
      %v913 = vrcp.pop %v912
      %v914 = vmul.f32 %v909, %v913
      %v915 = vpack.c.bf16 %v914, %v914
      %916 = vrot.lane.b32.xlu0 %v874, 64
      %v917 = vpop.permute.xlu0 %916
      %v919 = vsel %vm903, %v915, 0
      %vm921 = vcmask 1043456
      %v923 = vsel %vm921, %v917, 0
      %925 = vmatpush.bf16.msra.mxu0 0
      %926 = vmatpush.bf16.msra.mxu0 0
      %927 = vmatpush.bf16.msra.mxu0 0
      %928 = vmatpush.bf16.msra.mxu0 0
      %929 = vmatpush.bf16.msra.mxu0 0
      %930 = vmatpush.bf16.msra.mxu0 0
      %931 = vmatpush.bf16.msra.mxu0 0
      %932 = vmatpush.bf16.msra.mxu0 %v923
      %933 = vmatmul.bf16.gmra.mxu0 %v919
      %v934 = vpop.f32.mrf.mxu0
      %v935 = vadd.f32 0.0, %v934
      %v936 = vpop.f32.mrf.mxu0
      %937 = vdwg.mxu0
      %938 = vst.msk [vmem:[#allocation3] sm:$0xff] %vm878, %v935
      %939 = vrot.lane.b32.xlu0 %v874, 112
      %v940 = vpop.permute.xlu0 %939
      %941 = vrot.lane.b32.xlu0 %v874, 80
      %v942 = vpop.permute.xlu0 %941
      %v944 = vsel %vm878, %v940, 0
      %v947 = vsel %vm878, %v942, 0
      %949 = vmatpush.bf16.xpose.msra.mxu0 0
      %950 = vmatpush.bf16.xpose.msra.mxu0 0
      %951 = vmatpush.bf16.xpose.msra.mxu0 0
      %952 = vmatpush.bf16.xpose.msra.mxu0 0
      %953 = vmatpush.bf16.xpose.msra.mxu0 0
      %954 = vmatpush.bf16.xpose.msra.mxu0 0
      %955 = vmatpush.bf16.xpose.msra.mxu0 0
      %956 = vmatpush.bf16.xpose.msra.mxu0 %v947
      %957 = vmatmul.bf16.gmra.mxu0 %v944
      %v958 = vpop.f32.mrf.mxu0
      %v959 = vadd.f32 0.0, %v958
      %v960 = vpop.f32.mrf.mxu0
      %961 = vdwg.mxu0
      %v962 = vmul.f32 %v959, 0.25
      %v963 = vadd.f32 %v962, %v900
      %v964 = vsel %vm903, %v963, -inf
      %965 = vmax.xlane.f32.xlu0 %v964
      %v966 = vpop.xlane.xlu0 %965
      %v967 = vsub.f32 %v963, %v966
      %v968 = vmul.f32 %v967, 1.442695
      %v969 = vpow.pop %v968
      %v970 = vsel %vm903, %v969, 0.0
      %971 = vadd.xlane.f32.xlu0 %v970
      %v972 = vpop.xlane.xlu0 %971
      %v973 = vrcp.pop %v972
      %v974 = vmul.f32 %v969, %v973
      %v975 = vpack.c.bf16 %v974, %v974
      %976 = vrot.lane.b32.xlu0 %v874, 48
      %v977 = vpop.permute.xlu0 %976
      %v979 = vsel %vm903, %v975, 0
      %v982 = vsel %vm921, %v977, 0
      %984 = vmatpush.bf16.msra.mxu0 0
      %985 = vmatpush.bf16.msra.mxu0 0
      %986 = vmatpush.bf16.msra.mxu0 0
      %987 = vmatpush.bf16.msra.mxu0 0
      %988 = vmatpush.bf16.msra.mxu0 0
      %989 = vmatpush.bf16.msra.mxu0 0
      %990 = vmatpush.bf16.msra.mxu0 0
      %991 = vmatpush.bf16.msra.mxu0 %v982
      %992 = vmatmul.bf16.gmra.mxu0 %v979
      %v993 = vpop.f32.mrf.mxu0
      %v994 = vadd.f32 0.0, %v993
      %v995 = vpop.f32.mrf.mxu0
      %996 = vdwg.mxu0
      %998 = vrot.lane.b32.xlu0 %v994, 16
      %v999 = vpop.permute.xlu0 %998
      %vm1001 = vcmask 261248
      %1002 = vst.msk [vmem:[#allocation3] sm:$0xff] %vm1001, %v999
      %v1003 = vld [vmem:[#allocation3] sm:$0xff]
      %v1004 = vpack.c.bf16 %v1003, %v1003
      %v1005 = vld [vmem:[%s752] sm:$0xf]
      %v1006 = vld [vmem:[%s752 + $0x4] sm:$0xf]
      %v1007 = vld [vmem:[%s752 + $0x8] sm:$0xf]
      %v1008 = vld [vmem:[%s752 + $0xc] sm:$0xf]
      %v1009 = vld [vmem:[%s755] sm:$0x1]
      %v1011 = vperm.slane %v1009, 0
      %v1017 = vunpack.c.l.b16 %v1005
      %v1018 = vunpack.c.l.b16 %v1006
      %v1019 = vunpack.c.l.b16 %v1007
      %v1020 = vunpack.c.l.b16 %v1008
      %v1021 = vpack.c.b16 %v1018, %v1017
      %v1022 = vpack.c.b16 %v1020, %v1019
      %v1026 = vsel %vm857, %v1004, 0
      %1028 = vmatpush.bf16.msra.mxu0 0
      %1029 = vmatpush.bf16.msra.mxu0 0
      %1030 = vmatpush.bf16.msra.mxu0 0
      %1031 = vmatpush.bf16.msra.mxu0 0
      %1032 = vmatpush.bf16.msra.mxu0 0
      %1033 = vmatpush.bf16.msra.mxu0 0
      %1034 = vmatpush.bf16.msra.mxu0 %v1022
      %1035 = vmatpush.bf16.msra.mxu0 %v1021
      %1036 = vmatmul.bf16.gmra.mxu0 %v1026
      %v1037 = vpop.f32.mrf.mxu0
      %v1038 = vadd.f32 %v1011, %v1037
      %v1039 = vpop.f32.mrf.mxu0
      %1040 = vdwg.mxu0
      %v1041 = vadd.f32 %v834, %v1038
      %v1042 = vld [vmem:[%s758] sm:$0x1]
      %v1043 = vld [vmem:[%s761] sm:$0x1]
      %v1044 = vsel %vm857, %v1041, 0.0
      %1045 = vadd.xlane.f32.xlu0 %v1044
      %v1046 = vpop.xlane.xlu0 %1045
      %v1047 = vrcp.pop 32.0
      %v1048 = vmul.f32 32.0, %v1047
      %v1049 = vsub.f32 1.0, %v1048
      %v1050 = vmul.f32 %v1047, %v1049
      %v1051 = vadd.f32 %v1047, %v1050
      %vm1052 = vweird.f32 %v1047
      %v1053 = vsel %vm1052, %v1047, %v1051
      %v1054 = vmul.f32 %v1046, %v1053
      %v1055 = vsub.f32 %v1041, %v1054
      %v1056 = vmul.f32 %v1055, %v1055
      %v1057 = vsel %vm857, %v1056, 0.0
      %1058 = vadd.xlane.f32.xlu0 %v1057
      %v1059 = vpop.xlane.xlu0 %1058
      %v1060 = vmul.f32 %v1059, %v1053
      %v1061 = vadd.f32 %v1060, 1e-12
      %v1062 = vrsqrt.pop %v1061
      %v1063 = vmul.f32 %v1062, %v1061
      %v1064 = vmul.f32 %v1063, %v1062
      %v1065 = vmul.f32 0.5, %v1064
      %v1066 = vsub.f32 1.5, %v1065
      %v1067 = vmul.f32 %v1062, %v1066
      %vm1068 = vweird.f32 %v1061
      %vm1069 = vweird.f32 %v1062
      %vm1070 = vmor %vm1068, %vm1069
      %v1071 = vsel %vm1070, %v1062, %v1067
      %v1072 = vmul.f32 %v1055, %v1071
      %v1074 = vperm.slane %v1042, 0
      %v1076 = vmul.f32 %v1072, %v1074
      %v1078 = vperm.slane %v1043, 0
      %v1080 = vadd.f32 %v1076, %v1078
      %v1081 = vpack.c.bf16 %v1080, %v1080
      %v1082 = vld [vmem:[%s766] sm:$0xf]
      %v1083 = vld [vmem:[%s766 + $0x4] sm:$0xf]
      %v1084 = vld [vmem:[%s766 + $0x8] sm:$0xf]
      %v1085 = vld [vmem:[%s766 + $0xc] sm:$0xf]
      %v1086 = vld [vmem:[%s769] sm:$0x1]
      %v1088 = vperm.slane %v1086, 0
      %v1094 = vunpack.c.l.b16 %v1082
      %v1095 = vunpack.c.l.b16 %v1083
      %v1096 = vunpack.c.l.b16 %v1084
      %v1097 = vunpack.c.l.b16 %v1085
      %v1098 = vpack.c.b16 %v1095, %v1094
      %v1099 = vpack.c.b16 %v1097, %v1096
      %v1103 = vsel %vm857, %v1081, 0
      %1105 = vmatpush.bf16.msra.mxu0 0
      %1106 = vmatpush.bf16.msra.mxu0 0
      %1107 = vmatpush.bf16.msra.mxu0 0
      %1108 = vmatpush.bf16.msra.mxu0 0
      %1109 = vmatpush.bf16.msra.mxu0 0
      %1110 = vmatpush.bf16.msra.mxu0 0
      %1111 = vmatpush.bf16.msra.mxu0 %v1099
      %1112 = vmatpush.bf16.msra.mxu0 %v1098
      %1113 = vmatmul.bf16.gmra.mxu0 %v1103
      %v1114 = vpop.f32.mrf.mxu0
      %v1115 = vadd.f32 %v1088, %v1114
      %v1116 = vpop.f32.mrf.mxu0
      %1117 = vdwg.mxu0
      %v1118 = vmul.f32 %v1115, %v1115
      %v1119 = vmul.f32 %v1115, %v1118
      %v1120 = vmul.f32 %v1119, 0.044715
      %v1121 = vadd.f32 %v1115, %v1120
      %v1122 = vmul.f32 %v1121, 0.7978846
      %v1123 = vtanh.pop %v1122
      %v1124 = vadd.f32 %v1123, 1.0
      %v1125 = vmul.f32 %v1124, 0.5
      %v1126 = vmul.f32 %v1115, %v1125
      %v1127 = vpack.c.bf16 %v1126, %v1126
      %v1128 = vld [vmem:[%s774] sm:$0xf]
      %v1129 = vld [vmem:[%s774 + $0x4] sm:$0xf]
      %v1130 = vld [vmem:[%s774 + $0x8] sm:$0xf]
      %v1131 = vld [vmem:[%s774 + $0xc] sm:$0xf]
      %v1132 = vld [vmem:[%s774 + $0x10] sm:$0xf]
      %v1133 = vld [vmem:[%s774 + $0x14] sm:$0xf]
      %v1134 = vld [vmem:[%s774 + $0x18] sm:$0xf]
      %v1135 = vld [vmem:[%s774 + $0x1c] sm:$0xf]
      %v1136 = vld [vmem:[%s777] sm:$0x1]
      %v1138 = vperm.slane %v1136, 0
      %v1148 = vunpack.c.l.b16 %v1128
      %v1149 = vunpack.c.l.b16 %v1129
      %v1150 = vunpack.c.l.b16 %v1130
      %v1151 = vunpack.c.l.b16 %v1131
      %v1152 = vunpack.c.l.b16 %v1132
      %v1153 = vunpack.c.l.b16 %v1133
      %v1154 = vunpack.c.l.b16 %v1134
      %v1155 = vunpack.c.l.b16 %v1135
      %v1156 = vpack.c.b16 %v1149, %v1148
      %v1157 = vpack.c.b16 %v1151, %v1150
      %v1158 = vpack.c.b16 %v1153, %v1152
      %v1159 = vpack.c.b16 %v1155, %v1154
      %vm1164 = vcmask 523264
      %v1166 = vsel %vm1164, %v1127, 0
      %1168 = vmatpush.bf16.msra.mxu0 0
      %1169 = vmatpush.bf16.msra.mxu0 0
      %1170 = vmatpush.bf16.msra.mxu0 0
      %1171 = vmatpush.bf16.msra.mxu0 0
      %1172 = vmatpush.bf16.msra.mxu0 %v1159
      %1173 = vmatpush.bf16.msra.mxu0 %v1158
      %1174 = vmatpush.bf16.msra.mxu0 %v1157
      %1175 = vmatpush.bf16.msra.mxu0 %v1156
      %1176 = vmatmul.bf16.gmra.mxu0 %v1166
      %v1177 = vpop.f32.mrf.mxu0
      %v1178 = vadd.f32 %v1138, %v1177
      %v1179 = vpop.f32.mrf.mxu0
      %1180 = vdwg.mxu0
      %v1181 = vadd.f32 %v1080, %v1178
      %v1182 = vld [vmem:[%s780] sm:$0x1]
      %v1183 = vld [vmem:[%s783] sm:$0x1]
      %v1184 = vsel %vm857, %v1181, 0.0
      %1185 = vadd.xlane.f32.xlu0 %v1184
      %v1186 = vpop.xlane.xlu0 %1185
      %v1187 = vmul.f32 %v1186, %v1053
      %v1188 = vsub.f32 %v1181, %v1187
      %v1189 = vmul.f32 %v1188, %v1188
      %v1190 = vsel %vm857, %v1189, 0.0
      %1191 = vadd.xlane.f32.xlu0 %v1190
      %v1192 = vpop.xlane.xlu0 %1191
      %v1193 = vmul.f32 %v1192, %v1053
      %v1194 = vadd.f32 %v1193, 1e-12
      %v1195 = vrsqrt.pop %v1194
      %v1196 = vmul.f32 %v1195, %v1194
      %v1197 = vmul.f32 %v1196, %v1195
      %v1198 = vmul.f32 0.5, %v1197
      %v1199 = vsub.f32 1.5, %v1198
      %v1200 = vmul.f32 %v1195, %v1199
      %vm1201 = vweird.f32 %v1194
      %vm1202 = vweird.f32 %v1195
      %vm1203 = vmor %vm1201, %vm1202
      %v1204 = vsel %vm1203, %v1195, %v1200
      %v1205 = vmul.f32 %v1188, %v1204
      %v1207 = vperm.slane %v1182, 0
      %v1209 = vmul.f32 %v1205, %v1207
      %v1211 = vperm.slane %v1183, 0
      %v1213 = vadd.f32 %v1209, %v1211
      %1214 = vst.msk [vmem:[#allocation2] sm:$0xff] %vm857, %v1213
      %p1215 = scmp.eq.s32.totalorder %s34, 1
      // Predicated region
      $region97: #{predict_sentiment.1} parent=91 // pred_check
        %p1216 = pneg %p1215
      $region98: #{predict_sentiment.1} parent=91 // pred_check_branch
        %1218 = sbr.rel (%p1216) target = $region100
      $region99: #{predict_sentiment.1} parent=91 // pred_region
        %v1219 = vpack.c.bf16 %v1213, %v1213
        %v1220 = vld [vmem:[%s16] sm:$0xf]
        %v1221 = vld [vmem:[%s16 + $0x4] sm:$0xf]
        %v1222 = vld [vmem:[%s16 + $0x8] sm:$0xf]
        %v1223 = vld [vmem:[%s16 + $0xc] sm:$0xf]
        %v1224 = vld [vmem:[%s17] sm:$0x1]
        %v1229 = vunpack.c.l.b16 %v1220
        %v1230 = vunpack.c.l.b16 %v1221
        %v1231 = vunpack.c.l.b16 %v1222
        %v1232 = vunpack.c.l.b16 %v1223
        %v1233 = vpack.c.b16 %v1230, %v1229
        %v1234 = vpack.c.b16 %v1232, %v1231
        %v1238 = vsel %vm857, %v1219, 0
        %1240 = vmatpush.bf16.msra.mxu0 0
        %1241 = vmatpush.bf16.msra.mxu0 0
        %1242 = vmatpush.bf16.msra.mxu0 0
        %1243 = vmatpush.bf16.msra.mxu0 0
        %1244 = vmatpush.bf16.msra.mxu0 0
        %1245 = vmatpush.bf16.msra.mxu0 0
        %1246 = vmatpush.bf16.msra.mxu0 %v1234
        %1247 = vmatpush.bf16.msra.mxu0 %v1233
        %1248 = vmatmul.bf16.gmra.mxu0 %v1238
        %v1249 = vpop.f32.mrf.mxu0
        %v1250 = vadd.f32 %v1224, %v1249
        %v1251 = vpop.f32.mrf.mxu0
        %1252 = vdwg.mxu0
        %v1253 = vtanh.pop %v1250
        %vm1254 = vcmask 253952
        %1255 = vst.msk [vmem:[%s786] sm:$0x1] %vm1254, %v1253
      $region100: #{predict_sentiment.1} parent=91 // pred_fallthru
        _
      %p1256 = scmp.lt.s32.totalorder %s33, 1
      %s1257 = scalar_select %p1256, %s33, 1
      %s1258 = scalar_lea.vmem %s18, %s1257
      // Predicated region
      $region101: #{predict_sentiment.1} parent=91 // pred_check
        %p1259 = pneg %p507
      $region102: #{predict_sentiment.1} parent=91 // pred_check_branch
        %1261 = sbr.rel (%p1259) target = $region104
      $region103: #{predict_sentiment.1} parent=91 // pred_region
        _
      $region104: #{predict_sentiment.1} parent=91 // pred_fallthru
        _
    $region92: #{predict_sentiment.1} parent=5 // pred_fallthru
      _
    %p1262 = scmp.le.s32.totalorder 2, %s24
    // Predicated region
    $region105: #{predict_sentiment.1} parent=5 // pred_check
      %p1263 = pneg %p1262
    $region106: #{predict_sentiment.1} parent=5 // pred_check_branch
      %1265 = sbr.rel (%p1263) target = $region108
    $region107: #{predict_sentiment.1} parent=5 // pred_region
      %s1266 = ssub.s32 %s24, 2
      // Predicated region
      $region109: #{predict_sentiment.1} parent=107 // pred_check
        %p1267 = pneg %p513
      $region110: #{predict_sentiment.1} parent=107 // pred_check_branch
        %1269 = sbr.rel (%p1267) target = $region112
      $region111: #{predict_sentiment.1} parent=107 // pred_region
        %p1270 = scmp.lt.s32.totalorder %s35, 1
        %s1271 = scalar_select %p1270, %s35, 1
        %s1272 = scalar_lea.vmem %s18, %s1271
      $region112: #{predict_sentiment.1} parent=107 // pred_fallthru
        _
    $region108: #{predict_sentiment.1} parent=5 // pred_fallthru
      _
  $region6: #{predict_sentiment.1} parent=0 // loop_footer
    %s28 = sadd.s32 1, %s24
  $region7: #{predict_sentiment.1} parent=0 // loop_footer_branch
    %23 = sbr.rel target = $region3
  $region8: #{predict_sentiment.1} parent=0 // loop_exit
    _

</llo_original>
